<compile_context>
chip_gen: v7x
topology: tpu7x:2x2x1
jax: 0.10.0
libtpu: 0.0.40
codegen_flags: <defaults>
</compile_context>

<pallas_src>
import functools

import jax
import jax.numpy as jnp
from jax.experimental import pallas as pl
from jax.experimental.pallas import tpu as pltpu

EPS = 1e-5


def _conv_pool_tile(x_ref, w_ref, b_ref, acc_ref, *, thp, wp, cin, cpad):
    """3x3 conv (9 shifted MXU matmuls) + bias + 2x2 max-pool for one row tile.

    x_ref:   (1, 2*thp+2, 2*wp+2, cin) bf16   padded input slab (incl. halo)
    w_ref:   (9, cin, cpad)            bf16   tap-major weights, Cout zero-padded
    b_ref:   (1, cpad)                 f32
    acc_ref: (4*thp*wp, cpad)          f32    VMEM scratch (conv accumulator)
    returns  (thp, wp, cpad) f32 pooled conv+bias output.
    """
    R, W = 2 * thp, 2 * wp
    x = x_ref[0]                                                # (R+2, W+2, cin)
    acc = None
    for dy in range(3):
        for dx in range(3):
            tap = x[dy:dy + R, dx:dx + W, :].reshape(R * W, cin)
            y = jnp.dot(tap, w_ref[3 * dy + dx],
                        preferred_element_type=jnp.float32)     # (R*W, cpad)
            acc = y if acc is None else acc + y
    acc_ref[...] = acc
    # MaxPool2d(2, 2). Column pairs are adjacent rows of the flat accumulator
    # -> two stride-2 loads; row pairs are wp apart -> contiguous halves.
    pw = jnp.maximum(acc_ref[pl.ds(0, R * wp, 2), :],
                     acc_ref[pl.ds(1, R * wp, 2), :])           # (R*wp, cpad)
    pw = pw.reshape(thp, 2 * wp, cpad)
    pooled = jnp.maximum(pw[:, :wp, :], pw[:, wp:, :])          # (thp, wp, cpad)
    # Per-channel conv bias (commutes with the max, cancels under training-mode
    # BN, but kept for fidelity with the PyTorch module).
    return pooled + b_ref[...]


def _stats_kernel(x_ref, w_ref, b_ref, stats_ref, acc_ref, *, thp, wp, cin, cpad):
    """Pass 1: per-tile BatchNorm partials [sum, mean-shifted sum-of-squares]."""
    pooled = _conv_pool_tile(x_ref, w_ref, b_ref, acc_ref,
                             thp=thp, wp=wp, cin=cin, cpad=cpad)
    p = pooled.reshape(thp * wp, cpad)
    s = jnp.sum(p, axis=0, keepdims=True)                       # (1, cpad)
    d = p - s * (1.0 / (thp * wp))                              # shift by tile mean
    m2 = jnp.sum(d * d, axis=0, keepdims=True)                  # (1, cpad)
    stats_ref[...] = jnp.concatenate([s, m2], axis=0)[None]     # (1, 2, cpad)


def _norm_kernel(scale_ref, shift_ref, x_ref, w_ref, b_ref, out_ref, acc_ref, *,
                 thp, wp, cin, cpad, cout):
    """Pass 2: recompute conv+pool, apply precomputed BN scale/shift + ReLU."""
    pooled = _conv_pool_tile(x_ref, w_ref, b_ref, acc_ref,
                             thp=thp, wp=wp, cin=cin, cpad=cpad)
    y = jnp.maximum(pooled * scale_ref[...] + shift_ref[...], 0.0)
    out_ref[...] = y[:, :, :cout][None]                         # (1, thp, wp, cout)


def _pick_row_tile(hp, wp, cin, n_batch):
    """Pick pooled-row tile THp (a divisor of Hp) from a VMEM budget.

    Budget: f32 conv accumulator (4*THp*Wp, 128) <= 4 MiB and double-buffered
    bf16 input slab <= 8 MiB, so the per-step footprint stays well under the
    32 MiB scoped limit and leaves headroom on v7x's 64 MiB/TC VMEM.
    """
    w = 2 * wp
    best = 1
    for thp in range(hp, 0, -1):
        if hp % thp:
            continue
        acc_bytes = (2 * thp) * w * 128 * 4
        slab_bytes = 2 * (2 * thp + 2) * (w + 2) * cin * 2
        if acc_bytes <= 4 * 1024 * 1024 and slab_bytes <= 8 * 1024 * 1024:
            best = thp
            break
    # v7x has two TensorCores: keep >= 2 grid steps when the batch alone can't
    # provide them, so the "parallel" grid axes actually split across cores.
    # (With n_batch >= 2 this split is free, so single-TC v5e/v6e keep the
    # biggest tile.)
    if n_batch == 1 and best == hp and hp > 1:
        for thp in range(hp // 2, 0, -1):
            if hp % thp == 0:
                return thp
    return best


def unet_encoder(x, w, b, gamma, beta):
    """x: (N, Cin, H, W) f32; w: (Cout, Cin, 3, 3); b/gamma/beta: (Cout,)."""
    N, Cin, H, W = x.shape
    Cout = w.shape[0]
    assert H % 2 == 0 and W % 2 == 0
    Hp, Wp = H // 2, W // 2
    Cpad = ((Cout + 127) // 128) * 128           # lane-dense channel padding
    K = 9 * Cin
    M = N * Hp * Wp

    thp = _pick_row_tile(Hp, Wp, Cin, N)
    n_rt = Hp // thp
    SR = 2 * thp + 2                             # slab rows incl. 2-row halo
    NT = N * n_rt
    rows_per_tile = thp * Wp

    # ---- light glue (plain JAX): pad NHWC input, cut halo'd row slabs -------
    x_nhwc = jnp.transpose(x, (0, 2, 3, 1))                       # (N, H, W, Cin)
    x_pad = jnp.pad(x_nhwc, ((0, 0), (1, 1), (1, 1), (0, 0)))     # (N, H+2, W+2, Cin)
    if n_rt == 1:
        slabs = x_pad[:, None]
    else:
        slabs = jnp.stack(
            [x_pad[:, 2 * thp * j: 2 * thp * j + SR] for j in range(n_rt)], axis=1)
    x_slabs = slabs.reshape(NT, SR, W + 2, Cin).astype(jnp.bfloat16)

    # Tap-major weights (dy, dx) x (Cin, Cout), Cout zero-padded to 128 lanes.
    w_taps = jnp.transpose(w, (2, 3, 1, 0)).reshape(9, Cin, Cout)
    w_pad = jnp.zeros((9, Cin, Cpad), jnp.bfloat16).at[:, :, :Cout].set(
        w_taps.astype(jnp.bfloat16))
    b_pad = jnp.zeros((1, Cpad), jnp.float32).at[0, :Cout].set(b.astype(jnp.float32))
    g_pad = jnp.zeros((Cpad,), jnp.float32).at[:Cout].set(gamma.astype(jnp.float32))
    be_pad = jnp.zeros((Cpad,), jnp.float32).at[:Cout].set(beta.astype(jnp.float32))

    cparams = pltpu.CompilerParams(
        dimension_semantics=("parallel", "parallel"),
        vmem_limit_bytes=32 * 1024 * 1024)

    slab_spec = pl.BlockSpec((1, SR, W + 2, Cin),
                             lambda n, j: (n * n_rt + j, 0, 0, 0))
    w_spec = pl.BlockSpec((9, Cin, Cpad), lambda n, j: (0, 0, 0))
    vec_spec = pl.BlockSpec((1, Cpad), lambda n, j: (0, 0))
    scratch = [pltpu.VMEM((4 * thp * Wp, Cpad), jnp.float32)]

    conv_flops = 2 * N * H * W * K * Cpad
    slab_bytes = x_slabs.size * 2

    # ---- pass 1: conv + pool + per-tile BN partials (no pooled writeback) ---
    pstats = pl.pallas_call(
        functools.partial(_stats_kernel, thp=thp, wp=Wp, cin=Cin, cpad=Cpad),
        out_shape=jax.ShapeDtypeStruct((NT, 2, Cpad), jnp.float32),
        grid=(N, n_rt),
        in_specs=[slab_spec, w_spec, vec_spec],
        out_specs=pl.BlockSpec((1, 2, Cpad), lambda n, j: (n * n_rt + j, 0, 0)),
        scratch_shapes=scratch,
        compiler_params=cparams,
        cost_estimate=pl.CostEstimate(
            flops=conv_flops, transcendentals=0,
            bytes_accessed=slab_bytes + w_pad.size * 2 + NT * 2 * Cpad * 4),
    )(x_slabs, w_pad, b_pad)

    # ---- tiny cross-tile Welford combine + BN scale/shift precompute --------
    sums = pstats[:, 0, :]                                        # (NT, Cpad)
    m2s = pstats[:, 1, :]
    tile_mean = sums / rows_per_tile
    mean = jnp.sum(sums, axis=0) / M                              # (Cpad,)
    m2 = jnp.sum(m2s, axis=0) + rows_per_tile * jnp.sum(
        (tile_mean - mean) ** 2, axis=0)
    var = m2 / M                                                  # biased (training)
    scale = (g_pad * jax.lax.rsqrt(var + EPS)).reshape(1, Cpad)
    shift = (be_pad - mean * g_pad * jax.lax.rsqrt(var + EPS)).reshape(1, Cpad)

    # ---- pass 2: recompute conv+pool, normalize + ReLU, compact NHWC out ----
    out_nhwc = pl.pallas_call(
        functools.partial(_norm_kernel, thp=thp, wp=Wp, cin=Cin, cpad=Cpad,
                          cout=Cout),
        out_shape=jax.ShapeDtypeStruct((N, Hp, Wp, Cout), jnp.float32),
        grid=(N, n_rt),
        in_specs=[vec_spec, vec_spec, slab_spec, w_spec, vec_spec],
        out_specs=pl.BlockSpec((1, thp, Wp, Cout), lambda n, j: (n, j, 0, 0)),
        scratch_shapes=scratch,
        compiler_params=cparams,
        cost_estimate=pl.CostEstimate(
            flops=conv_flops + 3 * M * Cpad, transcendentals=0,
            bytes_accessed=slab_bytes + w_pad.size * 2 + M * Cout * 4),
    )(scale, shift, x_slabs, w_pad, b_pad)

    return jnp.transpose(out_nhwc, (0, 3, 1, 2))                  # (N, Cout, Hp, Wp)


def _reference(x, w, b, gamma, beta):
    y = jax.lax.conv_general_dilated(
        x, w, window_strides=(1, 1), padding=((1, 1), (1, 1)),
        dimension_numbers=("NCHW", "OIHW", "NCHW"))
    y = y + b[None, :, None, None]
    pooled = jax.lax.reduce_window(y, -jnp.inf, jax.lax.max,
                                   (1, 1, 2, 2), (1, 1, 2, 2), "VALID")
    mean = pooled.mean(axis=(0, 2, 3), keepdims=True)
    var = ((pooled - mean) ** 2).mean(axis=(0, 2, 3), keepdims=True)
    norm = (pooled - mean) / jnp.sqrt(var + EPS)
    out = norm * gamma[None, :, None, None] + beta[None, :, None, None]
    return jnp.maximum(out, 0.0)


if __name__ == "__main__":
    N, Cin, Cout, H, W = 2, 4, 8, 16, 16

    key = jax.random.PRNGKey(0)
    kx, kw, kb = jax.random.split(key, 3)
    x = jax.random.normal(kx, (N, Cin, H, W), dtype=jnp.float32)
    # Deterministic parameter init (Conv2d weight/bias random, BN defaults).
    w = 0.1 * jax.random.normal(kw, (Cout, Cin, 3, 3), dtype=jnp.float32)
    b = 0.1 * jax.random.normal(kb, (Cout,), dtype=jnp.float32)
    gamma = jnp.ones((Cout,), dtype=jnp.float32)    # BatchNorm2d weight init
    beta = jnp.zeros((Cout,), dtype=jnp.float32)    # BatchNorm2d bias init

    out = jax.block_until_ready(unet_encoder(x, w, b, gamma, beta))
    ref = jax.block_until_ready(_reference(x, w, b, gamma, beta))

    assert out.shape == (N, Cout, H // 2, W // 2), out.shape
    # Tolerance loosened vs. the f32 reference because conv operands are bf16
    # (accumulation, pooling and BN stay f32).
    assert jnp.allclose(out, ref, atol=2e-2, rtol=2e-2), float(
        jnp.max(jnp.abs(out - ref)))
    print("KERNEL_OK")
</pallas_src>

<mosaic_0001>
module attributes {stable_mosaic.version = 11 : i64} {
  func.func @_stats_kernel(%arg0: i32, %arg1: i32, %arg2: memref<1x18x18x4xbf16, #tpu.memory_space<vmem>>, %arg3: memref<9x4x128xbf16, #tpu.memory_space<vmem>>, %arg4: memref<1x128xf32, #tpu.memory_space<vmem>>, %arg5: memref<1x2x128xf32, #tpu.memory_space<vmem>>, %arg6: memref<256x128xf32, #tpu.memory_space<vmem>>) attributes {dimension_semantics = [#tpu.dimension_semantics<parallel>, #tpu.dimension_semantics<parallel>], iteration_bounds = array<i64: 2, 1>, scalar_prefetch = 0 : i64, scratch_operands = 1 : i64, tpu.core_type = #tpu.core_type<tc>, window_params = [{transform_indices = @transform_0, window_bounds = array<i64: 1, 18, 18, 4>}, {pipeline_mode = #tpu.pipeline_mode<synchronous>, transform_indices = @transform_1, window_bounds = array<i64: 9, 4, 128>}, {pipeline_mode = #tpu.pipeline_mode<synchronous>, transform_indices = @transform_2, window_bounds = array<i64: 1, 128>}, {transform_indices = @transform_3, window_bounds = array<i64: 1, 2, 128>}]} {
    %c0 = arith.constant 0 : index
    %c0_0 = arith.constant 0 : index
    %c0_1 = arith.constant 0 : index
    %c0_2 = arith.constant 0 : index
    %0 = vector.load %arg2[%c0, %c0_0, %c0_1, %c0_2] : memref<1x18x18x4xbf16, #tpu.memory_space<vmem>>, vector<1x18x18x4xbf16>
    %1 = vector.shape_cast %0 : vector<1x18x18x4xbf16> to vector<18x18x4xbf16>
    %2 = vector.extract_strided_slice %1 {offsets = [0, 0, 0], sizes = [16, 16, 4], strides = [1, 1, 1]} : vector<18x18x4xbf16> to vector<16x16x4xbf16>
    %3 = vector.shape_cast %2 : vector<16x16x4xbf16> to vector<256x4xbf16>
    %c0_3 = arith.constant 0 : index
    %c0_4 = arith.constant 0 : index
    %c0_5 = arith.constant 0 : index
    %4 = vector.load %arg3[%c0_3, %c0_4, %c0_5] : memref<9x4x128xbf16, #tpu.memory_space<vmem>>, vector<1x4x128xbf16>
    %5 = vector.shape_cast %4 : vector<1x4x128xbf16> to vector<4x128xbf16>
    %cst = arith.constant dense<0.000000e+00> : vector<256x128xf32>
    %6 = tpu.matmul %3, %5, %cst {dimension_numbers = #tpu.dot_dimension_numbers<[1], [0], [0], [1], [0, 0, 1, 1], [], []>} : vector<256x4xbf16>, vector<4x128xbf16>, vector<256x128xf32> -> vector<256x128xf32>
    %7 = vector.extract_strided_slice %1 {offsets = [0, 1, 0], sizes = [16, 16, 4], strides = [1, 1, 1]} : vector<18x18x4xbf16> to vector<16x16x4xbf16>
    %8 = vector.shape_cast %7 : vector<16x16x4xbf16> to vector<256x4xbf16>
    %c1 = arith.constant 1 : index
    %c0_6 = arith.constant 0 : index
    %c0_7 = arith.constant 0 : index
    %9 = vector.load %arg3[%c1, %c0_6, %c0_7] : memref<9x4x128xbf16, #tpu.memory_space<vmem>>, vector<1x4x128xbf16>
    %10 = vector.shape_cast %9 : vector<1x4x128xbf16> to vector<4x128xbf16>
    %cst_8 = arith.constant dense<0.000000e+00> : vector<256x128xf32>
    %11 = tpu.matmul %8, %10, %cst_8 {dimension_numbers = #tpu.dot_dimension_numbers<[1], [0], [0], [1], [0, 0, 1, 1], [], []>} : vector<256x4xbf16>, vector<4x128xbf16>, vector<256x128xf32> -> vector<256x128xf32>
    %12 = arith.addf %6, %11 : vector<256x128xf32>
    %13 = vector.extract_strided_slice %1 {offsets = [0, 2, 0], sizes = [16, 16, 4], strides = [1, 1, 1]} : vector<18x18x4xbf16> to vector<16x16x4xbf16>
    %14 = vector.shape_cast %13 : vector<16x16x4xbf16> to vector<256x4xbf16>
    %c2 = arith.constant 2 : index
    %c0_9 = arith.constant 0 : index
    %c0_10 = arith.constant 0 : index
    %15 = vector.load %arg3[%c2, %c0_9, %c0_10] : memref<9x4x128xbf16, #tpu.memory_space<vmem>>, vector<1x4x128xbf16>
    %16 = vector.shape_cast %15 : vector<1x4x128xbf16> to vector<4x128xbf16>
    %cst_11 = arith.constant dense<0.000000e+00> : vector<256x128xf32>
    %17 = tpu.matmul %14, %16, %cst_11 {dimension_numbers = #tpu.dot_dimension_numbers<[1], [0], [0], [1], [0, 0, 1, 1], [], []>} : vector<256x4xbf16>, vector<4x128xbf16>, vector<256x128xf32> -> vector<256x128xf32>
    %18 = arith.addf %12, %17 : vector<256x128xf32>
    %19 = vector.extract_strided_slice %1 {offsets = [1, 0, 0], sizes = [16, 16, 4], strides = [1, 1, 1]} : vector<18x18x4xbf16> to vector<16x16x4xbf16>
    %20 = vector.shape_cast %19 : vector<16x16x4xbf16> to vector<256x4xbf16>
    %c3 = arith.constant 3 : index
    %c0_12 = arith.constant 0 : index
    %c0_13 = arith.constant 0 : index
    %21 = vector.load %arg3[%c3, %c0_12, %c0_13] : memref<9x4x128xbf16, #tpu.memory_space<vmem>>, vector<1x4x128xbf16>
    %22 = vector.shape_cast %21 : vector<1x4x128xbf16> to vector<4x128xbf16>
    %cst_14 = arith.constant dense<0.000000e+00> : vector<256x128xf32>
    %23 = tpu.matmul %20, %22, %cst_14 {dimension_numbers = #tpu.dot_dimension_numbers<[1], [0], [0], [1], [0, 0, 1, 1], [], []>} : vector<256x4xbf16>, vector<4x128xbf16>, vector<256x128xf32> -> vector<256x128xf32>
    %24 = arith.addf %18, %23 : vector<256x128xf32>
    %25 = vector.extract_strided_slice %1 {offsets = [1, 1, 0], sizes = [16, 16, 4], strides = [1, 1, 1]} : vector<18x18x4xbf16> to vector<16x16x4xbf16>
    %26 = vector.shape_cast %25 : vector<16x16x4xbf16> to vector<256x4xbf16>
    %c4 = arith.constant 4 : index
    %c0_15 = arith.constant 0 : index
    %c0_16 = arith.constant 0 : index
    %27 = vector.load %arg3[%c4, %c0_15, %c0_16] : memref<9x4x128xbf16, #tpu.memory_space<vmem>>, vector<1x4x128xbf16>
    %28 = vector.shape_cast %27 : vector<1x4x128xbf16> to vector<4x128xbf16>
    %cst_17 = arith.constant dense<0.000000e+00> : vector<256x128xf32>
    %29 = tpu.matmul %26, %28, %cst_17 {dimension_numbers = #tpu.dot_dimension_numbers<[1], [0], [0], [1], [0, 0, 1, 1], [], []>} : vector<256x4xbf16>, vector<4x128xbf16>, vector<256x128xf32> -> vector<256x128xf32>
    %30 = arith.addf %24, %29 : vector<256x128xf32>
    %31 = vector.extract_strided_slice %1 {offsets = [1, 2, 0], sizes = [16, 16, 4], strides = [1, 1, 1]} : vector<18x18x4xbf16> to vector<16x16x4xbf16>
    %32 = vector.shape_cast %31 : vector<16x16x4xbf16> to vector<256x4xbf16>
    %c5 = arith.constant 5 : index
    %c0_18 = arith.constant 0 : index
    %c0_19 = arith.constant 0 : index
    %33 = vector.load %arg3[%c5, %c0_18, %c0_19] : memref<9x4x128xbf16, #tpu.memory_space<vmem>>, vector<1x4x128xbf16>
    %34 = vector.shape_cast %33 : vector<1x4x128xbf16> to vector<4x128xbf16>
    %cst_20 = arith.constant dense<0.000000e+00> : vector<256x128xf32>
    %35 = tpu.matmul %32, %34, %cst_20 {dimension_numbers = #tpu.dot_dimension_numbers<[1], [0], [0], [1], [0, 0, 1, 1], [], []>} : vector<256x4xbf16>, vector<4x128xbf16>, vector<256x128xf32> -> vector<256x128xf32>
    %36 = arith.addf %30, %35 : vector<256x128xf32>
    %37 = vector.extract_strided_slice %1 {offsets = [2, 0, 0], sizes = [16, 16, 4], strides = [1, 1, 1]} : vector<18x18x4xbf16> to vector<16x16x4xbf16>
    %38 = vector.shape_cast %37 : vector<16x16x4xbf16> to vector<256x4xbf16>
    %c6 = arith.constant 6 : index
    %c0_21 = arith.constant 0 : index
    %c0_22 = arith.constant 0 : index
    %39 = vector.load %arg3[%c6, %c0_21, %c0_22] : memref<9x4x128xbf16, #tpu.memory_space<vmem>>, vector<1x4x128xbf16>
    %40 = vector.shape_cast %39 : vector<1x4x128xbf16> to vector<4x128xbf16>
    %cst_23 = arith.constant dense<0.000000e+00> : vector<256x128xf32>
    %41 = tpu.matmul %38, %40, %cst_23 {dimension_numbers = #tpu.dot_dimension_numbers<[1], [0], [0], [1], [0, 0, 1, 1], [], []>} : vector<256x4xbf16>, vector<4x128xbf16>, vector<256x128xf32> -> vector<256x128xf32>
    %42 = arith.addf %36, %41 : vector<256x128xf32>
    %43 = vector.extract_strided_slice %1 {offsets = [2, 1, 0], sizes = [16, 16, 4], strides = [1, 1, 1]} : vector<18x18x4xbf16> to vector<16x16x4xbf16>
    %44 = vector.shape_cast %43 : vector<16x16x4xbf16> to vector<256x4xbf16>
    %c7 = arith.constant 7 : index
    %c0_24 = arith.constant 0 : index
    %c0_25 = arith.constant 0 : index
    %45 = vector.load %arg3[%c7, %c0_24, %c0_25] : memref<9x4x128xbf16, #tpu.memory_space<vmem>>, vector<1x4x128xbf16>
    %46 = vector.shape_cast %45 : vector<1x4x128xbf16> to vector<4x128xbf16>
    %cst_26 = arith.constant dense<0.000000e+00> : vector<256x128xf32>
    %47 = tpu.matmul %44, %46, %cst_26 {dimension_numbers = #tpu.dot_dimension_numbers<[1], [0], [0], [1], [0, 0, 1, 1], [], []>} : vector<256x4xbf16>, vector<4x128xbf16>, vector<256x128xf32> -> vector<256x128xf32>
    %48 = arith.addf %42, %47 : vector<256x128xf32>
    %49 = vector.extract_strided_slice %1 {offsets = [2, 2, 0], sizes = [16, 16, 4], strides = [1, 1, 1]} : vector<18x18x4xbf16> to vector<16x16x4xbf16>
    %50 = vector.shape_cast %49 : vector<16x16x4xbf16> to vector<256x4xbf16>
    %c8 = arith.constant 8 : index
    %c0_27 = arith.constant 0 : index
    %c0_28 = arith.constant 0 : index
    %51 = vector.load %arg3[%c8, %c0_27, %c0_28] : memref<9x4x128xbf16, #tpu.memory_space<vmem>>, vector<1x4x128xbf16>
    %52 = vector.shape_cast %51 : vector<1x4x128xbf16> to vector<4x128xbf16>
    %cst_29 = arith.constant dense<0.000000e+00> : vector<256x128xf32>
    %53 = tpu.matmul %50, %52, %cst_29 {dimension_numbers = #tpu.dot_dimension_numbers<[1], [0], [0], [1], [0, 0, 1, 1], [], []>} : vector<256x4xbf16>, vector<4x128xbf16>, vector<256x128xf32> -> vector<256x128xf32>
    %54 = arith.addf %48, %53 : vector<256x128xf32>
    %c0_30 = arith.constant 0 : index
    %c0_31 = arith.constant 0 : index
    %55 = vector.load %arg6[%c0_30, %c0_31] : memref<256x128xf32, #tpu.memory_space<vmem>>, vector<256x128xf32>
    tpu.vector_store %arg6[%c0_30, %c0_31], %54 {strides = array<i32>} : memref<256x128xf32, #tpu.memory_space<vmem>>, vector<256x128xf32>,
    %c0_32 = arith.constant 0 : index
    %c0_33 = arith.constant 0 : index
    %56 = tpu.strided_load %arg6[%c0_32, %c0_33] {strides = array<i32: 2, 1>} : memref<256x128xf32, #tpu.memory_space<vmem>>, vector<128x128xf32>
    %c1_34 = arith.constant 1 : index
    %c0_35 = arith.constant 0 : index
    %57 = tpu.strided_load %arg6[%c1_34, %c0_35] {strides = array<i32: 2, 1>} : memref<256x128xf32, #tpu.memory_space<vmem>>, vector<128x128xf32>
    %58 = arith.maximumf %56, %57 : vector<128x128xf32>
    %59 = vector.shape_cast %58 : vector<128x128xf32> to vector<8x16x128xf32>
    %60 = vector.extract_strided_slice %59 {offsets = [0, 0, 0], sizes = [8, 8, 128], strides = [1, 1, 1]} : vector<8x16x128xf32> to vector<8x8x128xf32>
    %61 = vector.extract_strided_slice %59 {offsets = [0, 8, 0], sizes = [8, 8, 128], strides = [1, 1, 1]} : vector<8x16x128xf32> to vector<8x8x128xf32>
    %62 = arith.maximumf %60, %61 : vector<8x8x128xf32>
    %c0_36 = arith.constant 0 : index
    %c0_37 = arith.constant 0 : index
    %63 = vector.load %arg4[%c0_36, %c0_37] : memref<1x128xf32, #tpu.memory_space<vmem>>, vector<1x128xf32>
    %64 = vector.shape_cast %63 : vector<1x128xf32> to vector<1x1x128xf32>
    %65 = vector.broadcast %64 : vector<1x1x128xf32> to vector<8x8x128xf32>
    %66 = arith.addf %62, %65 : vector<8x8x128xf32>
    %67 = vector.shape_cast %66 : vector<8x8x128xf32> to vector<64x128xf32>
    %cst_38 = arith.constant dense<0.000000e+00> : vector<128xf32>
    %68 = vector.multi_reduction <add>, %67, %cst_38 [0] : vector<64x128xf32> to vector<128xf32>
    %69 = vector.shape_cast %68 : vector<128xf32> to vector<1x128xf32>
    %cst_39 = arith.constant 1.562500e-02 : f32
    %70 = vector.broadcast %cst_39 : f32 to vector<1x128xf32>
    %71 = arith.mulf %69, %70 : vector<1x128xf32>
    %72 = vector.broadcast %71 : vector<1x128xf32> to vector<64x128xf32>
    %73 = arith.subf %67, %72 : vector<64x128xf32>
    %74 = arith.mulf %73, %73 : vector<64x128xf32>
    %cst_40 = arith.constant dense<0.000000e+00> : vector<128xf32>
    %75 = vector.multi_reduction <add>, %74, %cst_40 [0] : vector<64x128xf32> to vector<128xf32>
    %76 = vector.shape_cast %75 : vector<128xf32> to vector<1x128xf32>
    %77 = tpu.concatenate %69, %76 in 0 : vector<1x128xf32>, vector<1x128xf32> -> vector<2x128xf32>
    %78 = vector.shape_cast %77 : vector<2x128xf32> to vector<1x2x128xf32>
    %c0_41 = arith.constant 0 : index
    %c0_42 = arith.constant 0 : index
    %c0_43 = arith.constant 0 : index
    %79 = vector.load %arg5[%c0_41, %c0_42, %c0_43] : memref<1x2x128xf32, #tpu.memory_space<vmem>>, vector<1x2x128xf32>
    tpu.vector_store %arg5[%c0_41, %c0_42, %c0_43], %78 {strides = array<i32>} : memref<1x2x128xf32, #tpu.memory_space<vmem>>, vector<1x2x128xf32>,
    return
  }
  func.func @transform_0(%arg0: i32, %arg1: i32) -> (i32, i32, i32, i32) {
    %c1_i32 = arith.constant 1 : i32
    %0 = arith.muli %arg0, %c1_i32 : i32
    %1 = arith.addi %0, %arg1 : i32
    %c0_i32 = arith.constant 0 : i32
    %c0_i32_0 = arith.constant 0 : i32
    %c0_i32_1 = arith.constant 0 : i32
    %c0_i32_2 = arith.constant 0 : i32
    return %1, %c0_i32, %c0_i32_0, %c0_i32_1 : i32, i32, i32, i32
  }
  func.func @transform_1(%arg0: i32, %arg1: i32) -> (i32, i32, i32) {
    %c0_i32 = arith.constant 0 : i32
    %c0_i32_0 = arith.constant 0 : i32
    %c0_i32_1 = arith.constant 0 : i32
    %c0_i32_2 = arith.constant 0 : i32
    return %c0_i32, %c0_i32_0, %c0_i32_1 : i32, i32, i32
  }
  func.func @transform_2(%arg0: i32, %arg1: i32) -> (i32, i32) {
    %c0_i32 = arith.constant 0 : i32
    %c0_i32_0 = arith.constant 0 : i32
    %c0_i32_1 = arith.constant 0 : i32
    return %c0_i32, %c0_i32_0 : i32, i32
  }
  func.func @transform_3(%arg0: i32, %arg1: i32) -> (i32, i32, i32) {
    %c1_i32 = arith.constant 1 : i32
    %0 = arith.muli %arg0, %c1_i32 : i32
    %1 = arith.addi %0, %arg1 : i32
    %c0_i32 = arith.constant 0 : i32
    %c0_i32_0 = arith.constant 0 : i32
    %c0_i32_1 = arith.constant 0 : i32
    return %1, %c0_i32, %c0_i32_0 : i32, i32, i32
  }
}

</mosaic_0001>

<llo_original>
// kernel: tpu_custom_call.1
$region0: #{tpu_custom_call.1}
  #allocation0 [shape = 'u32[]', space=smem, size = 0x4, offset = 0x4, fixed_abs, tag = 'smem constant byte address 0x4 - core index']
  #allocation1 [shape = 'u32[144,128]{1,0:T(1,128)}', space=vmem, size = 0x12000, scoped, tag = 'internal scratch']
  #allocation2 [shape = 'f32[256,128]{1,0:T(8,128)}', space=vmem, size = 0x20000, scoped, tag = 'scratch operand']
  %s0 = inlined_call_operand.vmem [shape: bf16[2,18,18,4], index: 0, kind: input, shape index: {}]
  %s1 = inlined_call_operand.vmem [shape: bf16[9,4,128], index: 1, kind: input, shape index: {}]
  %s2 = inlined_call_operand.vmem [shape: f32[1,128], index: 2, kind: input, shape index: {}]
  %s3 = inlined_call_operand.hbm [shape: f32[2,2,128], index: 3, kind: output, shape index: {}]
  %s4 = sld [smem:[#allocation0]]
  $region45: #{tpu_custom_call.1} parent=0
    _
  %s6 = ssub.s32 1, %s4
  %s7 = scalar_select 0, %s6, %s4
  $region1: #{tpu_custom_call.1} parent=0
    #allocation3 [shape = 'u8[2048]{0}', space=vmem, size = 0x800, scoped, tag = 'output window, operand 0']
    #allocation4 [shape = 's32[2]{0}', space=sflag, size = 0x8, scoped, tag = 'scoped memory for tpu_custom_call.1']
    %8 = vsyncpa [#allocation4], 0
    %s9 = scalar_lea.sflag [#allocation4], 1
    %10 = vsyncpa %s9, 0
    loop: start=0, step=1, limit=4
    $region2: #{tpu_custom_call.1} parent=1 // loop_pre_header
      _
    $region3: #{tpu_custom_call.1} parent=1 // loop_header
      %s12 = sphi 0, %s16
      %p13 = scmp.ge.s32.totalorder %s12, 4
      %s19 = sphi 0, %s31
      %s20 = sphi 0, %s27
      %s21 = sphi 0, %s19
      %s22 = sphi 0, %s20
      %s23 = sphi 0, %s21
      %s24 = sphi 0, %s22
      %s36 = sphi 0, %s38
      %s39 = sphi 0, %s36
      %s40 = sphi 0, %s39
      %s56 = sphi 0, %s40
      %s60 = sphi 0, %s60
      %s62 = sphi 0, %s60
      %s63 = sphi 0, %s62
      %s77 = sphi 0, %s63
      %s81 = sphi 0, %s81
      %s83 = sphi 0, %s81
      %s84 = sphi 0, %s83
      %s98 = sphi 0, %s84
      %s106 = sphi 0, %s108
      %s109 = sphi 0, %s106
      %s110 = sphi 0, %s109
      %s126 = sphi 0, %s110
    $region4: #{tpu_custom_call.1} parent=1 // loop_header_branch
      %15 = sbr.rel (%p13) target = $region8
    $region5: #{tpu_custom_call.1} parent=1 // loop_body
      %s17 = ssub.s32 %s12, 1
      %s18 = ssub.s32 %s12, 2
      %s25 = sadd.s32 1, %s20
      %p26 = scmp.ge.s32.totalorder %s25, 1
      %s27 = scalar_select %p26, 0, %s25
      %s28 = sadd.s32 1, %s19
      %s29 = scalar_select %p26, %s28, %s19
      %p30 = scmp.ge.s32.totalorder %s29, 2
      %s31 = scalar_select %p30, 0, %s29
      %s32 = sadd.s32 %s19, %s20
      %s33 = sadd.s32 %s31, %s27
      %s34 = ssub.s32 %s32, %s33
      %p35 = scmp.eq.s32.totalorder %s34, 0
      %s37 = sadd.s32 %s36, 1
      %s38 = scalar_select %p35, %s36, %s37
      %p41 = pneg %p35
      %p42 = scmp.eq.s32.totalorder %s12, 1
      %p43 = por %p41, %p42
      %p44 = scmp.ne.s32.totalorder %s36, %s39
      %p45 = scmp.eq.s32.totalorder %s12, 0
      %p46 = por %p44, %p45
      %p47 = scmp.ne.s32.totalorder %s36, %s39
      %p48 = scmp.eq.s32.totalorder %s17, 1
      %p49 = por %p47, %p48
      %p50 = scmp.ne.s32.totalorder %s39, %s40
      %p51 = scmp.eq.s32.totalorder %s17, 0
      %p52 = por %p50, %p51
      %p53 = scmp.ne.s32.totalorder %s39, %s40
      %p54 = scmp.eq.s32.totalorder %s18, 1
      %p55 = por %p53, %p54
      %p57 = scmp.ne.s32.totalorder %s40, %s56
      %p58 = scmp.eq.s32.totalorder %s18, 0
      %p59 = por %p57, %p58
      %s61 = sadd.s32 %s60, 1
      %p64 = scmp.eq.s32.totalorder %s12, 1
      %p65 = scmp.ne.s32.totalorder %s60, %s62
      %p66 = scmp.eq.s32.totalorder %s12, 0
      %p67 = por %p65, %p66
      %p68 = scmp.ne.s32.totalorder %s60, %s62
      %p69 = scmp.eq.s32.totalorder %s17, 1
      %p70 = por %p68, %p69
      %p71 = scmp.ne.s32.totalorder %s62, %s63
      %p72 = scmp.eq.s32.totalorder %s17, 0
      %p73 = por %p71, %p72
      %p74 = scmp.ne.s32.totalorder %s62, %s63
      %p75 = scmp.eq.s32.totalorder %s18, 1
      %p76 = por %p74, %p75
      %p78 = scmp.ne.s32.totalorder %s63, %s77
      %p79 = scmp.eq.s32.totalorder %s18, 0
      %p80 = por %p78, %p79
      %s82 = sadd.s32 %s81, 1
      %p85 = scmp.eq.s32.totalorder %s12, 1
      %p86 = scmp.ne.s32.totalorder %s81, %s83
      %p87 = scmp.eq.s32.totalorder %s12, 0
      %p88 = por %p86, %p87
      %p89 = scmp.ne.s32.totalorder %s81, %s83
      %p90 = scmp.eq.s32.totalorder %s17, 1
      %p91 = por %p89, %p90
      %p92 = scmp.ne.s32.totalorder %s83, %s84
      %p93 = scmp.eq.s32.totalorder %s17, 0
      %p94 = por %p92, %p93
      %p95 = scmp.ne.s32.totalorder %s83, %s84
      %p96 = scmp.eq.s32.totalorder %s18, 1
      %p97 = por %p95, %p96
      %p99 = scmp.ne.s32.totalorder %s84, %s98
      %p100 = scmp.eq.s32.totalorder %s18, 0
      %p101 = por %p99, %p100
      %s102 = sadd.s32 %s19, %s20
      %s103 = sadd.s32 %s31, %s27
      %s104 = ssub.s32 %s102, %s103
      %p105 = scmp.eq.s32.totalorder %s104, 0
      %s107 = sadd.s32 %s106, 1
      %s108 = scalar_select %p105, %s106, %s107
      %p111 = pneg %p105
      %p112 = scmp.eq.s32.totalorder %s12, 1
      %p113 = por %p111, %p112
      %p114 = scmp.ne.s32.totalorder %s106, %s109
      %p115 = scmp.eq.s32.totalorder %s12, 0
      %p116 = por %p114, %p115
      %p117 = scmp.ne.s32.totalorder %s106, %s109
      %p118 = scmp.eq.s32.totalorder %s17, 1
      %p119 = por %p117, %p118
      %p120 = scmp.ne.s32.totalorder %s109, %s110
      %p121 = scmp.eq.s32.totalorder %s17, 0
      %p122 = por %p120, %p121
      %p123 = scmp.ne.s32.totalorder %s109, %s110
      %p124 = scmp.eq.s32.totalorder %s18, 1
      %p125 = por %p123, %p124
      %p127 = scmp.ne.s32.totalorder %s110, %s126
      %p128 = scmp.eq.s32.totalorder %s18, 0
      %p129 = por %p127, %p128
      %p130 = scmp.le.s32.totalorder 1, %s12
      %p131 = scmp.lt.s32.totalorder %s12, 3
      %p132 = pnand %p130, %p131
      %p133 = pneg %p132
      // Predicated region
      $region9: #{tpu_custom_call.1} parent=5 // pred_check
        _
      $region10: #{tpu_custom_call.1} parent=5 // pred_check_branch
        %135 = sbr.rel (%p132) target = $region12
      $region11: #{tpu_custom_call.1} parent=5 // pred_region
        %s136 = ssub.s32 %s12, 1
        // Predicated region
        $region13: #{tpu_custom_call.1} parent=11 // pred_check
          %p137 = pneg %p73
        $region14: #{tpu_custom_call.1} parent=11 // pred_check_branch
          %139 = sbr.rel (%p137) target = $region16
        $region15: #{tpu_custom_call.1} parent=11 // pred_region
          _
        $region16: #{tpu_custom_call.1} parent=11 // pred_fallthru
          _
        // Predicated region
        $region17: #{tpu_custom_call.1} parent=11 // pred_check
          %p140 = pneg %p94
        $region18: #{tpu_custom_call.1} parent=11 // pred_check_branch
          %142 = sbr.rel (%p140) target = $region20
        $region19: #{tpu_custom_call.1} parent=11 // pred_region
          _
        $region20: #{tpu_custom_call.1} parent=11 // pred_fallthru
          _
      $region12: #{tpu_custom_call.1} parent=5 // pred_fallthru
        _
      %p143 = scmp.lt.s32.totalorder %s12, 2
      // Predicated region
      $region21: #{tpu_custom_call.1} parent=5 // pred_check
        %p144 = pneg %p143
      $region22: #{tpu_custom_call.1} parent=5 // pred_check_branch
        %146 = sbr.rel (%p144) target = $region24
      $region23: #{tpu_custom_call.1} parent=5 // pred_region
        // Predicated region
        $region25: #{tpu_custom_call.1} parent=23 // pred_check
          %p147 = pneg %p46
        $region26: #{tpu_custom_call.1} parent=23 // pred_check_branch
          %149 = sbr.rel (%p147) target = $region28
        $region27: #{tpu_custom_call.1} parent=23 // pred_region
          %s150 = sadd.s32 %s19, %s20
          %p151 = scmp.lt.s32.totalorder %s150, 1
          %s152 = scalar_select %p151, %s150, 1
          %s153 = smul.addr %s152, 54
          %s154 = smul.addr %s153, 4
          %s155 = scalar_lea.vmem %s0, %s154
          %s156 = sadd.s32 %s19, %s20
        $region28: #{tpu_custom_call.1} parent=23 // pred_fallthru
          _
      $region24: #{tpu_custom_call.1} parent=5 // pred_fallthru
        _
      %p157 = scmp.le.s32.totalorder 1, %s12
      %p158 = scmp.lt.s32.totalorder %s12, 3
      %p159 = pnand %p157, %p158
      %p160 = pneg %p159
      // Predicated region
      $region29: #{tpu_custom_call.1} parent=5 // pred_check
        _
      $region30: #{tpu_custom_call.1} parent=5 // pred_check_branch
        %162 = sbr.rel (%p159) target = $region32
      $region31: #{tpu_custom_call.1} parent=5 // pred_region
        %s163 = ssub.s32 %s12, 1
        %s164 = sadd.s32 %s21, %s22
        %p165 = scmp.lt.s32.totalorder %s164, 1
        %s166 = scalar_select %p165, %s164, 1
        %s167 = smul.addr %s166, 54
        %s168 = smul.addr %s167, 4
        %s169 = scalar_lea.vmem %s0, %s168
        %p170 = pneg %p52
        %p171 = pneg %p49
        %p172 = pneg %p73
        %p173 = pneg %p70
        %p174 = pneg %p94
        %p175 = pneg %p91
        %p176 = pneg %p122
        %p177 = pneg %p119
        %s178 = sand.u32 %s109, 1
        %s179 = scalar_lea.sflag [#allocation4], %s178
        %s180 = sand.u32 %s109, 1
        %s181 = smul.addr %s180, 2
        %s182 = scalar_lea.vmem [#allocation3], %s181
        %s183 = sadd.s32 %s21, %s22
        %p184 = scmp.lt.s32.totalorder %s183, 1
        %s185 = scalar_select %p184, %s183, 1
        %s186 = smul.addr %s185, 54
        %s187 = smul.addr %s186, 4
        %s188 = scalar_lea.vmem %s0, %s187
        %s189 = sadd.s32 %s21, %s22
        %s190 = sadd.s32 %s21, %s22
        %v192 = vld [vmem:[%s188] sm:$0xf]
        %v193 = vld [vmem:[%s188 + $0x4] sm:$0xf]
        %v194 = vld [vmem:[%s188 + $0x8] sm:$0x1]
        %v195 = vld [vmem:[%s188 + $0xc] sm:$0xf]
        %v196 = vld [vmem:[%s188 + $0x10] sm:$0xf]
        %v197 = vld [vmem:[%s188 + $0x14] sm:$0x1]
        %v198 = vld [vmem:[%s188 + $0x18] sm:$0xf]
        %v199 = vld [vmem:[%s188 + $0x1c] sm:$0xf]
        %v200 = vld [vmem:[%s188 + $0x20] sm:$0x1]
        %v201 = vld [vmem:[%s188 + $0x24] sm:$0xf]
        %v202 = vld [vmem:[%s188 + $0x28] sm:$0xf]
        %v203 = vld [vmem:[%s188 + $0x2c] sm:$0x1]
        %v204 = vld [vmem:[%s188 + $0x30] sm:$0xf]
        %v205 = vld [vmem:[%s188 + $0x34] sm:$0xf]
        %v206 = vld [vmem:[%s188 + $0x38] sm:$0x1]
        %v207 = vld [vmem:[%s188 + $0x3c] sm:$0xf]
        %v208 = vld [vmem:[%s188 + $0x40] sm:$0xf]
        %v209 = vld [vmem:[%s188 + $0x44] sm:$0x1]
        %v210 = vld [vmem:[%s188 + $0x48] sm:$0xf]
        %v211 = vld [vmem:[%s188 + $0x4c] sm:$0xf]
        %v212 = vld [vmem:[%s188 + $0x50] sm:$0x1]
        %v213 = vld [vmem:[%s188 + $0x54] sm:$0xf]
        %v214 = vld [vmem:[%s188 + $0x58] sm:$0xf]
        %v215 = vld [vmem:[%s188 + $0x5c] sm:$0x1]
        %v216 = vld [vmem:[%s188 + $0x60] sm:$0xf]
        %v217 = vld [vmem:[%s188 + $0x64] sm:$0xf]
        %v218 = vld [vmem:[%s188 + $0x68] sm:$0x1]
        %v219 = vld [vmem:[%s188 + $0x6c] sm:$0xf]
        %v220 = vld [vmem:[%s188 + $0x70] sm:$0xf]
        %v221 = vld [vmem:[%s188 + $0x74] sm:$0x1]
        %v222 = vld [vmem:[%s188 + $0x78] sm:$0xf]
        %v223 = vld [vmem:[%s188 + $0x7c] sm:$0xf]
        %v224 = vld [vmem:[%s188 + $0x80] sm:$0x1]
        %v225 = vld [vmem:[%s188 + $0x84] sm:$0xf]
        %v226 = vld [vmem:[%s188 + $0x88] sm:$0xf]
        %v227 = vld [vmem:[%s188 + $0x8c] sm:$0x1]
        %v228 = vld [vmem:[%s188 + $0x90] sm:$0xf]
        %v229 = vld [vmem:[%s188 + $0x94] sm:$0xf]
        %v230 = vld [vmem:[%s188 + $0x98] sm:$0x1]
        %v231 = vld [vmem:[%s188 + $0x9c] sm:$0xf]
        %v232 = vld [vmem:[%s188 + $0xa0] sm:$0xf]
        %v233 = vld [vmem:[%s188 + $0xa4] sm:$0x1]
        %v234 = vld [vmem:[%s188 + $0xa8] sm:$0xf]
        %v235 = vld [vmem:[%s188 + $0xac] sm:$0xf]
        %v236 = vld [vmem:[%s188 + $0xb0] sm:$0x1]
        %v237 = vld [vmem:[%s188 + $0xb4] sm:$0xf]
        %v238 = vld [vmem:[%s188 + $0xb8] sm:$0xf]
        %v239 = vld [vmem:[%s188 + $0xbc] sm:$0x1]
        %v240 = vld [vmem:[%s188 + $0xc0] sm:$0xf]
        %v241 = vld [vmem:[%s188 + $0xc4] sm:$0xf]
        %v242 = vld [vmem:[%s188 + $0xc8] sm:$0x1]
        %v243 = vld [vmem:[%s188 + $0xcc] sm:$0xf]
        %v244 = vld [vmem:[%s188 + $0xd0] sm:$0xf]
        %v245 = vld [vmem:[%s188 + $0xd4] sm:$0x1]
        %v246 = vld [vmem:[%s1] sm:$0x3]
        %vm247 = vsmask.f32 3328
        %vm248 = vsmask.f32 7440
        %vm249 = vmor %vm247, %vm248
        %v251 = vshrl.u32 %v192, 16
        %v253 = vrot.slane %v251, 4
        %v254 = vshll.u32 %v192, 16
        %v256 = vrot.slane %v254, 5
        %v257 = vor.u32 %v253, %v256
        %v258 = vrot.slane %v257, 4
        %v260 = vshll.u32 %v193, 16
        %v262 = vrot.slane %v260, 5
        %v263 = vsel %vm249, %v258, %v262
        %v264 = vshrl.u32 %v193, 16
        %v266 = vrot.slane %v264, 4
        %v267 = vor.u32 %v266, %v262
        %v268 = vrot.slane %v267, 4
        %v270 = vshll.u32 %v194, 16
        %v272 = vrot.slane %v270, 5
        %v273 = vsel %vm249, %v268, %v272
        %v275 = vshrl.u32 %v195, 16
        %v277 = vrot.slane %v275, 4
        %v278 = vshll.u32 %v195, 16
        %v280 = vrot.slane %v278, 5
        %v281 = vor.u32 %v277, %v280
        %v282 = vrot.slane %v281, 4
        %v284 = vshll.u32 %v196, 16
        %v286 = vrot.slane %v284, 5
        %v287 = vsel %vm249, %v282, %v286
        %v288 = vshrl.u32 %v196, 16
        %v290 = vrot.slane %v288, 4
        %v291 = vor.u32 %v290, %v286
        %v292 = vrot.slane %v291, 4
        %v294 = vshll.u32 %v197, 16
        %v296 = vrot.slane %v294, 5
        %v297 = vsel %vm249, %v292, %v296
        %v299 = vshrl.u32 %v198, 16
        %v301 = vrot.slane %v299, 4
        %v302 = vshll.u32 %v198, 16
        %v304 = vrot.slane %v302, 5
        %v305 = vor.u32 %v301, %v304
        %v306 = vrot.slane %v305, 4
        %v308 = vshll.u32 %v199, 16
        %v310 = vrot.slane %v308, 5
        %v311 = vsel %vm249, %v306, %v310
        %v312 = vshrl.u32 %v199, 16
        %v314 = vrot.slane %v312, 4
        %v315 = vor.u32 %v314, %v310
        %v316 = vrot.slane %v315, 4
        %v318 = vshll.u32 %v200, 16
        %v320 = vrot.slane %v318, 5
        %v321 = vsel %vm249, %v316, %v320
        %v323 = vshrl.u32 %v201, 16
        %v325 = vrot.slane %v323, 4
        %v326 = vshll.u32 %v201, 16
        %v328 = vrot.slane %v326, 5
        %v329 = vor.u32 %v325, %v328
        %v330 = vrot.slane %v329, 4
        %v332 = vshll.u32 %v202, 16
        %v334 = vrot.slane %v332, 5
        %v335 = vsel %vm249, %v330, %v334
        %v336 = vshrl.u32 %v202, 16
        %v338 = vrot.slane %v336, 4
        %v339 = vor.u32 %v338, %v334
        %v340 = vrot.slane %v339, 4
        %v342 = vshll.u32 %v203, 16
        %v344 = vrot.slane %v342, 5
        %v345 = vsel %vm249, %v340, %v344
        %v347 = vshrl.u32 %v204, 16
        %v349 = vrot.slane %v347, 4
        %v350 = vshll.u32 %v204, 16
        %v352 = vrot.slane %v350, 5
        %v353 = vor.u32 %v349, %v352
        %v354 = vrot.slane %v353, 4
        %v356 = vshll.u32 %v205, 16
        %v358 = vrot.slane %v356, 5
        %v359 = vsel %vm249, %v354, %v358
        %v360 = vshrl.u32 %v205, 16
        %v362 = vrot.slane %v360, 4
        %v363 = vor.u32 %v362, %v358
        %v364 = vrot.slane %v363, 4
        %v366 = vshll.u32 %v206, 16
        %v368 = vrot.slane %v366, 5
        %v369 = vsel %vm249, %v364, %v368
        %v371 = vshrl.u32 %v207, 16
        %v373 = vrot.slane %v371, 4
        %v374 = vshll.u32 %v207, 16
        %v376 = vrot.slane %v374, 5
        %v377 = vor.u32 %v373, %v376
        %v378 = vrot.slane %v377, 4
        %v380 = vshll.u32 %v208, 16
        %v382 = vrot.slane %v380, 5
        %v383 = vsel %vm249, %v378, %v382
        %v384 = vshrl.u32 %v208, 16
        %v386 = vrot.slane %v384, 4
        %v387 = vor.u32 %v386, %v382
        %v388 = vrot.slane %v387, 4
        %v390 = vshll.u32 %v209, 16
        %v392 = vrot.slane %v390, 5
        %v393 = vsel %vm249, %v388, %v392
        %v395 = vshrl.u32 %v210, 16
        %v397 = vrot.slane %v395, 4
        %v398 = vshll.u32 %v210, 16
        %v400 = vrot.slane %v398, 5
        %v401 = vor.u32 %v397, %v400
        %v402 = vrot.slane %v401, 4
        %v404 = vshll.u32 %v211, 16
        %v406 = vrot.slane %v404, 5
        %v407 = vsel %vm249, %v402, %v406
        %v408 = vshrl.u32 %v211, 16
        %v410 = vrot.slane %v408, 4
        %v411 = vor.u32 %v410, %v406
        %v412 = vrot.slane %v411, 4
        %v414 = vshll.u32 %v212, 16
        %v416 = vrot.slane %v414, 5
        %v417 = vsel %vm249, %v412, %v416
        %v419 = vshrl.u32 %v213, 16
        %v421 = vrot.slane %v419, 4
        %v422 = vshll.u32 %v213, 16
        %v424 = vrot.slane %v422, 5
        %v425 = vor.u32 %v421, %v424
        %v426 = vrot.slane %v425, 4
        %v428 = vshll.u32 %v214, 16
        %v430 = vrot.slane %v428, 5
        %v431 = vsel %vm249, %v426, %v430
        %v432 = vshrl.u32 %v214, 16
        %v434 = vrot.slane %v432, 4
        %v435 = vor.u32 %v434, %v430
        %v436 = vrot.slane %v435, 4
        %v438 = vshll.u32 %v215, 16
        %v440 = vrot.slane %v438, 5
        %v441 = vsel %vm249, %v436, %v440
        %v443 = vshrl.u32 %v216, 16
        %v445 = vrot.slane %v443, 4
        %v446 = vshll.u32 %v216, 16
        %v448 = vrot.slane %v446, 5
        %v449 = vor.u32 %v445, %v448
        %v450 = vrot.slane %v449, 4
        %v452 = vshll.u32 %v217, 16
        %v454 = vrot.slane %v452, 5
        %v455 = vsel %vm249, %v450, %v454
        %v456 = vshrl.u32 %v217, 16
        %v458 = vrot.slane %v456, 4
        %v459 = vor.u32 %v458, %v454
        %v460 = vrot.slane %v459, 4
        %v462 = vshll.u32 %v218, 16
        %v464 = vrot.slane %v462, 5
        %v465 = vsel %vm249, %v460, %v464
        %v467 = vshrl.u32 %v219, 16
        %v469 = vrot.slane %v467, 4
        %v470 = vshll.u32 %v219, 16
        %v472 = vrot.slane %v470, 5
        %v473 = vor.u32 %v469, %v472
        %v474 = vrot.slane %v473, 4
        %v476 = vshll.u32 %v220, 16
        %v478 = vrot.slane %v476, 5
        %v479 = vsel %vm249, %v474, %v478
        %v480 = vshrl.u32 %v220, 16
        %v482 = vrot.slane %v480, 4
        %v483 = vor.u32 %v482, %v478
        %v484 = vrot.slane %v483, 4
        %v486 = vshll.u32 %v221, 16
        %v488 = vrot.slane %v486, 5
        %v489 = vsel %vm249, %v484, %v488
        %v491 = vshrl.u32 %v222, 16
        %v493 = vrot.slane %v491, 4
        %v494 = vshll.u32 %v222, 16
        %v496 = vrot.slane %v494, 5
        %v497 = vor.u32 %v493, %v496
        %v498 = vrot.slane %v497, 4
        %v500 = vshll.u32 %v223, 16
        %v502 = vrot.slane %v500, 5
        %v503 = vsel %vm249, %v498, %v502
        %v504 = vshrl.u32 %v223, 16
        %v506 = vrot.slane %v504, 4
        %v507 = vor.u32 %v506, %v502
        %v508 = vrot.slane %v507, 4
        %v510 = vshll.u32 %v224, 16
        %v512 = vrot.slane %v510, 5
        %v513 = vsel %vm249, %v508, %v512
        %v515 = vshrl.u32 %v225, 16
        %v517 = vrot.slane %v515, 4
        %v518 = vshll.u32 %v225, 16
        %v520 = vrot.slane %v518, 5
        %v521 = vor.u32 %v517, %v520
        %v522 = vrot.slane %v521, 4
        %v524 = vshll.u32 %v226, 16
        %v526 = vrot.slane %v524, 5
        %v527 = vsel %vm249, %v522, %v526
        %v528 = vshrl.u32 %v226, 16
        %v530 = vrot.slane %v528, 4
        %v531 = vor.u32 %v530, %v526
        %v532 = vrot.slane %v531, 4
        %v534 = vshll.u32 %v227, 16
        %v536 = vrot.slane %v534, 5
        %v537 = vsel %vm249, %v532, %v536
        %v539 = vshrl.u32 %v228, 16
        %v541 = vrot.slane %v539, 4
        %v542 = vshll.u32 %v228, 16
        %v544 = vrot.slane %v542, 5
        %v545 = vor.u32 %v541, %v544
        %v546 = vrot.slane %v545, 4
        %v548 = vshll.u32 %v229, 16
        %v550 = vrot.slane %v548, 5
        %v551 = vsel %vm249, %v546, %v550
        %v552 = vshrl.u32 %v229, 16
        %v554 = vrot.slane %v552, 4
        %v555 = vor.u32 %v554, %v550
        %v556 = vrot.slane %v555, 4
        %v558 = vshll.u32 %v230, 16
        %v560 = vrot.slane %v558, 5
        %v561 = vsel %vm249, %v556, %v560
        %v563 = vshrl.u32 %v231, 16
        %v565 = vrot.slane %v563, 4
        %v566 = vshll.u32 %v231, 16
        %v568 = vrot.slane %v566, 5
        %v569 = vor.u32 %v565, %v568
        %v570 = vrot.slane %v569, 4
        %v572 = vshll.u32 %v232, 16
        %v574 = vrot.slane %v572, 5
        %v575 = vsel %vm249, %v570, %v574
        %v576 = vshrl.u32 %v232, 16
        %v578 = vrot.slane %v576, 4
        %v579 = vor.u32 %v578, %v574
        %v580 = vrot.slane %v579, 4
        %v582 = vshll.u32 %v233, 16
        %v584 = vrot.slane %v582, 5
        %v585 = vsel %vm249, %v580, %v584
        %v587 = vshrl.u32 %v234, 16
        %v589 = vrot.slane %v587, 4
        %v590 = vshll.u32 %v234, 16
        %v592 = vrot.slane %v590, 5
        %v593 = vor.u32 %v589, %v592
        %v594 = vrot.slane %v593, 4
        %v596 = vshll.u32 %v235, 16
        %v598 = vrot.slane %v596, 5
        %v599 = vsel %vm249, %v594, %v598
        %v600 = vshrl.u32 %v235, 16
        %v602 = vrot.slane %v600, 4
        %v603 = vor.u32 %v602, %v598
        %v604 = vrot.slane %v603, 4
        %v606 = vshll.u32 %v236, 16
        %v608 = vrot.slane %v606, 5
        %v609 = vsel %vm249, %v604, %v608
        %v611 = vshrl.u32 %v237, 16
        %v613 = vrot.slane %v611, 4
        %v614 = vshll.u32 %v237, 16
        %v616 = vrot.slane %v614, 5
        %v617 = vor.u32 %v613, %v616
        %v618 = vrot.slane %v617, 4
        %v620 = vshll.u32 %v238, 16
        %v622 = vrot.slane %v620, 5
        %v623 = vsel %vm249, %v618, %v622
        %v624 = vshrl.u32 %v238, 16
        %v626 = vrot.slane %v624, 4
        %v627 = vor.u32 %v626, %v622
        %v628 = vrot.slane %v627, 4
        %v630 = vshll.u32 %v239, 16
        %v632 = vrot.slane %v630, 5
        %v633 = vsel %vm249, %v628, %v632
        %s634 = scalar_lea.vmem %s1, 2
        %v635 = vld [vmem:[%s634] sm:$0x3]
        %v636 = vunpack.c.l.b16 %v263
        %v637 = vunpack.c.l.b16 %v273
        %v638 = vunpack.c.l.b16 %v287
        %v639 = vunpack.c.l.b16 %v297
        %v640 = vunpack.c.l.b16 %v311
        %v641 = vunpack.c.l.b16 %v321
        %v642 = vunpack.c.l.b16 %v335
        %v643 = vunpack.c.l.b16 %v345
        %v644 = vunpack.c.l.b16 %v359
        %v645 = vunpack.c.l.b16 %v369
        %v646 = vunpack.c.l.b16 %v383
        %v647 = vunpack.c.l.b16 %v393
        %v648 = vunpack.c.l.b16 %v407
        %v649 = vunpack.c.l.b16 %v417
        %v650 = vunpack.c.l.b16 %v431
        %v651 = vunpack.c.l.b16 %v441
        %v652 = vunpack.c.l.b16 %v455
        %v653 = vunpack.c.l.b16 %v465
        %v654 = vunpack.c.l.b16 %v479
        %v655 = vunpack.c.l.b16 %v489
        %v656 = vunpack.c.l.b16 %v503
        %v657 = vunpack.c.l.b16 %v513
        %v658 = vunpack.c.l.b16 %v527
        %v659 = vunpack.c.l.b16 %v537
        %v660 = vunpack.c.l.b16 %v551
        %v661 = vunpack.c.l.b16 %v561
        %v662 = vunpack.c.l.b16 %v575
        %v663 = vunpack.c.l.b16 %v585
        %v664 = vunpack.c.l.b16 %v599
        %v665 = vunpack.c.l.b16 %v609
        %v666 = vunpack.c.l.b16 %v623
        %v667 = vunpack.c.l.b16 %v633
        %v668 = vpack.c.b16 %v637, %v636
        %v669 = vpack.c.b16 %v639, %v638
        %v670 = vpack.c.b16 %v641, %v640
        %v671 = vpack.c.b16 %v643, %v642
        %v672 = vpack.c.b16 %v645, %v644
        %v673 = vpack.c.b16 %v647, %v646
        %v674 = vpack.c.b16 %v649, %v648
        %v675 = vpack.c.b16 %v651, %v650
        %v676 = vpack.c.b16 %v653, %v652
        %v677 = vpack.c.b16 %v655, %v654
        %v678 = vpack.c.b16 %v657, %v656
        %v679 = vpack.c.b16 %v659, %v658
        %v680 = vpack.c.b16 %v661, %v660
        %v681 = vpack.c.b16 %v663, %v662
        %v682 = vpack.c.b16 %v665, %v664
        %v683 = vpack.c.b16 %v667, %v666
        %vm684 = vcmask 31744
        %v686 = vsel %vm684, %v668, 0
        %v689 = vsel %vm684, %v669, 0
        %v692 = vsel %vm684, %v670, 0
        %v695 = vsel %vm684, %v671, 0
        %v698 = vsel %vm684, %v672, 0
        %v701 = vsel %vm684, %v673, 0
        %v704 = vsel %vm684, %v674, 0
        %v707 = vsel %vm684, %v675, 0
        %v710 = vsel %vm684, %v676, 0
        %v713 = vsel %vm684, %v677, 0
        %v716 = vsel %vm684, %v678, 0
        %v719 = vsel %vm684, %v679, 0
        %v722 = vsel %vm684, %v680, 0
        %v725 = vsel %vm684, %v681, 0
        %v728 = vsel %vm684, %v682, 0
        %v731 = vsel %vm684, %v683, 0
        %vm733 = vcmask 1041408
        %v735 = vsel %vm733, %v635, 0
        %737 = vmatprep.subr.bf16.mxu0 0
        %738 = vmatpush1.bf16.msra.mxu0 %v735
        %739 = vmatprep.subr.bf16.mxu0 0
        %740 = vmatpush1.bf16.msra.mxu0 0
        %741 = vmatprep.subr.bf16.mxu0 0
        %742 = vmatpush1.bf16.msra.mxu0 0
        %743 = vmatprep.subr.bf16.mxu0 0
        %744 = vmatpush1.bf16.msra.mxu0 0
        %745 = vmatprep.subr.bf16.mxu0 0
        %746 = vmatpush1.bf16.msra.mxu0 0
        %747 = vmatprep.subr.bf16.mxu0 0
        %748 = vmatpush1.bf16.msra.mxu0 0
        %749 = vmatprep.subr.bf16.mxu0 0
        %750 = vmatpush1.bf16.msra.mxu0 0
        %751 = vmatprep.subr.bf16.mxu0 0
        %752 = vmatpush1.bf16.msra.mxu0 0
        %753 = vmatprep.subr.bf16.mxu0 0
        %754 = vmatpush1.bf16.msra.mxu0 0
        %755 = vmatprep.subr.bf16.mxu0 0
        %756 = vmatpush1.bf16.msra.mxu0 0
        %757 = vmatprep.subr.bf16.mxu0 0
        %758 = vmatpush1.bf16.msra.mxu0 0
        %759 = vmatprep.subr.bf16.mxu0 0
        %760 = vmatpush1.bf16.msra.mxu0 0
        %761 = vmatprep.subr.bf16.mxu0 0
        %762 = vmatpush1.bf16.msra.mxu0 0
        %763 = vmatprep.subr.bf16.mxu0 0
        %764 = vmatpush1.bf16.msra.mxu0 0
        %765 = vmatprep.subr.bf16.mxu0 0
        %766 = vmatpush1.bf16.msra.mxu0 0
        %767 = vmatprep.subr.bf16.mxu0 0
        %768 = vmatpush1.bf16.msra.mxu0 0
        %769 = vmatprep.mubr.bf16.mxu0 0
        %770 = vmatmul.mubr.bf16.gmra.mrb[0].mxu0 %v686
        %v771 = vpop.f32.mrb[0].mxu0
        %v772 = vadd.f32 0.0, %v771
        %v773 = vpop.f32.mrb[0].mxu0
        %v774 = vpop.f32.mrb[0].mxu0
        %v775 = vadd.f32 0.0, %v774
        %v776 = vpop.f32.mrb[0].mxu0
        %777 = vmatprep.mubr.bf16.mxu0 0
        %778 = vmatmul.mubr.bf16.gmra.mrb[0].mxu0 %v689
        %v779 = vpop.f32.mrb[0].mxu0
        %v780 = vadd.f32 0.0, %v779
        %v781 = vpop.f32.mrb[0].mxu0
        %v782 = vpop.f32.mrb[0].mxu0
        %v783 = vadd.f32 0.0, %v782
        %v784 = vpop.f32.mrb[0].mxu0
        %785 = vmatprep.mubr.bf16.mxu0 0
        %786 = vmatmul.mubr.bf16.gmra.mrb[0].mxu0 %v692
        %v787 = vpop.f32.mrb[0].mxu0
        %v788 = vadd.f32 0.0, %v787
        %v789 = vpop.f32.mrb[0].mxu0
        %v790 = vpop.f32.mrb[0].mxu0
        %v791 = vadd.f32 0.0, %v790
        %v792 = vpop.f32.mrb[0].mxu0
        %793 = vmatprep.mubr.bf16.mxu0 0
        %794 = vmatmul.mubr.bf16.gmra.mrb[0].mxu0 %v695
        %v795 = vpop.f32.mrb[0].mxu0
        %v796 = vadd.f32 0.0, %v795
        %v797 = vpop.f32.mrb[0].mxu0
        %v798 = vpop.f32.mrb[0].mxu0
        %v799 = vadd.f32 0.0, %v798
        %v800 = vpop.f32.mrb[0].mxu0
        %801 = vmatprep.mubr.bf16.mxu0 0
        %802 = vmatmul.mubr.bf16.gmra.mrb[0].mxu0 %v698
        %v803 = vpop.f32.mrb[0].mxu0
        %v804 = vadd.f32 0.0, %v803
        %v805 = vpop.f32.mrb[0].mxu0
        %v806 = vpop.f32.mrb[0].mxu0
        %v807 = vadd.f32 0.0, %v806
        %v808 = vpop.f32.mrb[0].mxu0
        %809 = vmatprep.mubr.bf16.mxu0 0
        %810 = vmatmul.mubr.bf16.gmra.mrb[0].mxu0 %v701
        %v811 = vpop.f32.mrb[0].mxu0
        %v812 = vadd.f32 0.0, %v811
        %v813 = vpop.f32.mrb[0].mxu0
        %v814 = vpop.f32.mrb[0].mxu0
        %v815 = vadd.f32 0.0, %v814
        %v816 = vpop.f32.mrb[0].mxu0
        %817 = vmatprep.mubr.bf16.mxu0 0
        %818 = vmatmul.mubr.bf16.gmra.mrb[0].mxu0 %v704
        %v819 = vpop.f32.mrb[0].mxu0
        %v820 = vadd.f32 0.0, %v819
        %v821 = vpop.f32.mrb[0].mxu0
        %v822 = vpop.f32.mrb[0].mxu0
        %v823 = vadd.f32 0.0, %v822
        %v824 = vpop.f32.mrb[0].mxu0
        %825 = vmatprep.mubr.bf16.mxu0 0
        %826 = vmatmul.mubr.bf16.gmra.mrb[0].mxu0 %v707
        %v827 = vpop.f32.mrb[0].mxu0
        %v828 = vadd.f32 0.0, %v827
        %v829 = vpop.f32.mrb[0].mxu0
        %v830 = vpop.f32.mrb[0].mxu0
        %v831 = vadd.f32 0.0, %v830
        %v832 = vpop.f32.mrb[0].mxu0
        %833 = vmatprep.mubr.bf16.mxu0 0
        %834 = vmatmul.mubr.bf16.gmra.mrb[0].mxu0 %v710
        %v835 = vpop.f32.mrb[0].mxu0
        %v836 = vadd.f32 0.0, %v835
        %v837 = vpop.f32.mrb[0].mxu0
        %v838 = vpop.f32.mrb[0].mxu0
        %v839 = vadd.f32 0.0, %v838
        %v840 = vpop.f32.mrb[0].mxu0
        %841 = vmatprep.mubr.bf16.mxu0 0
        %842 = vmatmul.mubr.bf16.gmra.mrb[0].mxu0 %v713
        %v843 = vpop.f32.mrb[0].mxu0
        %v844 = vadd.f32 0.0, %v843
        %v845 = vpop.f32.mrb[0].mxu0
        %v846 = vpop.f32.mrb[0].mxu0
        %v847 = vadd.f32 0.0, %v846
        %v848 = vpop.f32.mrb[0].mxu0
        %849 = vmatprep.mubr.bf16.mxu0 0
        %850 = vmatmul.mubr.bf16.gmra.mrb[0].mxu0 %v716
        %v851 = vpop.f32.mrb[0].mxu0
        %v852 = vadd.f32 0.0, %v851
        %v853 = vpop.f32.mrb[0].mxu0
        %v854 = vpop.f32.mrb[0].mxu0
        %v855 = vadd.f32 0.0, %v854
        %v856 = vpop.f32.mrb[0].mxu0
        %857 = vmatprep.mubr.bf16.mxu0 0
        %858 = vmatmul.mubr.bf16.gmra.mrb[0].mxu0 %v719
        %v859 = vpop.f32.mrb[0].mxu0
        %v860 = vadd.f32 0.0, %v859
        %v861 = vpop.f32.mrb[0].mxu0
        %v862 = vpop.f32.mrb[0].mxu0
        %v863 = vadd.f32 0.0, %v862
        %v864 = vpop.f32.mrb[0].mxu0
        %865 = vmatprep.mubr.bf16.mxu0 0
        %866 = vmatmul.mubr.bf16.gmra.mrb[0].mxu0 %v722
        %v867 = vpop.f32.mrb[0].mxu0
        %v868 = vadd.f32 0.0, %v867
        %v869 = vpop.f32.mrb[0].mxu0
        %v870 = vpop.f32.mrb[0].mxu0
        %v871 = vadd.f32 0.0, %v870
        %v872 = vpop.f32.mrb[0].mxu0
        %873 = vmatprep.mubr.bf16.mxu0 0
        %874 = vmatmul.mubr.bf16.gmra.mrb[0].mxu0 %v725
        %v875 = vpop.f32.mrb[0].mxu0
        %v876 = vadd.f32 0.0, %v875
        %v877 = vpop.f32.mrb[0].mxu0
        %v878 = vpop.f32.mrb[0].mxu0
        %v879 = vadd.f32 0.0, %v878
        %v880 = vpop.f32.mrb[0].mxu0
        %881 = vmatprep.mubr.bf16.mxu0 0
        %882 = vmatmul.mubr.bf16.gmra.mrb[0].mxu0 %v728
        %v883 = vpop.f32.mrb[0].mxu0
        %v884 = vadd.f32 0.0, %v883
        %v885 = vpop.f32.mrb[0].mxu0
        %v886 = vpop.f32.mrb[0].mxu0
        %v887 = vadd.f32 0.0, %v886
        %v888 = vpop.f32.mrb[0].mxu0
        %889 = vmatprep.mubr.bf16.mxu0 0
        %890 = vmatmul.mubr.bf16.gmra.mrb[0].mxu0 %v731
        %v891 = vpop.f32.mrb[0].mxu0
        %v892 = vadd.f32 0.0, %v891
        %v893 = vpop.f32.mrb[0].mxu0
        %v894 = vpop.f32.mrb[0].mxu0
        %v895 = vadd.f32 0.0, %v894
        %v896 = vpop.f32.mrb[0].mxu0
        %897 = vdwg.mxu0
        %v930 = vunpack.c.l.b16 %v192
        %v931 = vunpack.c.l.b16 %v193
        %v932 = vunpack.c.l.b16 %v195
        %v933 = vunpack.c.l.b16 %v196
        %v934 = vunpack.c.l.b16 %v198
        %v935 = vunpack.c.l.b16 %v199
        %v936 = vunpack.c.l.b16 %v201
        %v937 = vunpack.c.l.b16 %v202
        %v938 = vunpack.c.l.b16 %v204
        %v939 = vunpack.c.l.b16 %v205
        %v940 = vunpack.c.l.b16 %v207
        %v941 = vunpack.c.l.b16 %v208
        %v942 = vunpack.c.l.b16 %v210
        %v943 = vunpack.c.l.b16 %v211
        %v944 = vunpack.c.l.b16 %v213
        %v945 = vunpack.c.l.b16 %v214
        %v946 = vunpack.c.l.b16 %v216
        %v947 = vunpack.c.l.b16 %v217
        %v948 = vunpack.c.l.b16 %v219
        %v949 = vunpack.c.l.b16 %v220
        %v950 = vunpack.c.l.b16 %v222
        %v951 = vunpack.c.l.b16 %v223
        %v952 = vunpack.c.l.b16 %v225
        %v953 = vunpack.c.l.b16 %v226
        %v954 = vunpack.c.l.b16 %v228
        %v955 = vunpack.c.l.b16 %v229
        %v956 = vunpack.c.l.b16 %v231
        %v957 = vunpack.c.l.b16 %v232
        %v958 = vunpack.c.l.b16 %v234
        %v959 = vunpack.c.l.b16 %v235
        %v960 = vunpack.c.l.b16 %v237
        %v961 = vunpack.c.l.b16 %v238
        %v962 = vpack.c.b16 %v931, %v930
        %v963 = vpack.c.b16 %v933, %v932
        %v964 = vpack.c.b16 %v935, %v934
        %v965 = vpack.c.b16 %v937, %v936
        %v966 = vpack.c.b16 %v939, %v938
        %v967 = vpack.c.b16 %v941, %v940
        %v968 = vpack.c.b16 %v943, %v942
        %v969 = vpack.c.b16 %v945, %v944
        %v970 = vpack.c.b16 %v947, %v946
        %v971 = vpack.c.b16 %v949, %v948
        %v972 = vpack.c.b16 %v951, %v950
        %v973 = vpack.c.b16 %v953, %v952
        %v974 = vpack.c.b16 %v955, %v954
        %v975 = vpack.c.b16 %v957, %v956
        %v976 = vpack.c.b16 %v959, %v958
        %v977 = vpack.c.b16 %v961, %v960
        %v979 = vsel %vm684, %v962, 0
        %v982 = vsel %vm684, %v963, 0
        %v985 = vsel %vm684, %v964, 0
        %v988 = vsel %vm684, %v965, 0
        %v991 = vsel %vm684, %v966, 0
        %v994 = vsel %vm684, %v967, 0
        %v997 = vsel %vm684, %v968, 0
        %v1000 = vsel %vm684, %v969, 0
        %v1003 = vsel %vm684, %v970, 0
        %v1006 = vsel %vm684, %v971, 0
        %v1009 = vsel %vm684, %v972, 0
        %v1012 = vsel %vm684, %v973, 0
        %v1015 = vsel %vm684, %v974, 0
        %v1018 = vsel %vm684, %v975, 0
        %v1021 = vsel %vm684, %v976, 0
        %v1024 = vsel %vm684, %v977, 0
        %v1027 = vsel %vm733, %v246, 0
        %1029 = vmatprep.subr.bf16.mxu0 0
        %1030 = vmatpush1.bf16.msra.mxu0 %v1027
        %1031 = vmatprep.subr.bf16.mxu0 0
        %1032 = vmatpush1.bf16.msra.mxu0 0
        %1033 = vmatprep.subr.bf16.mxu0 0
        %1034 = vmatpush1.bf16.msra.mxu0 0
        %1035 = vmatprep.subr.bf16.mxu0 0
        %1036 = vmatpush1.bf16.msra.mxu0 0
        %1037 = vmatprep.subr.bf16.mxu0 0
        %1038 = vmatpush1.bf16.msra.mxu0 0
        %1039 = vmatprep.subr.bf16.mxu0 0
        %1040 = vmatpush1.bf16.msra.mxu0 0
        %1041 = vmatprep.subr.bf16.mxu0 0
        %1042 = vmatpush1.bf16.msra.mxu0 0
        %1043 = vmatprep.subr.bf16.mxu0 0
        %1044 = vmatpush1.bf16.msra.mxu0 0
        %1045 = vmatprep.subr.bf16.mxu0 0
        %1046 = vmatpush1.bf16.msra.mxu0 0
        %1047 = vmatprep.subr.bf16.mxu0 0
        %1048 = vmatpush1.bf16.msra.mxu0 0
        %1049 = vmatprep.subr.bf16.mxu0 0
        %1050 = vmatpush1.bf16.msra.mxu0 0
        %1051 = vmatprep.subr.bf16.mxu0 0
        %1052 = vmatpush1.bf16.msra.mxu0 0
        %1053 = vmatprep.subr.bf16.mxu0 0
        %1054 = vmatpush1.bf16.msra.mxu0 0
        %1055 = vmatprep.subr.bf16.mxu0 0
        %1056 = vmatpush1.bf16.msra.mxu0 0
        %1057 = vmatprep.subr.bf16.mxu0 0
        %1058 = vmatpush1.bf16.msra.mxu0 0
        %1059 = vmatprep.subr.bf16.mxu0 0
        %1060 = vmatpush1.bf16.msra.mxu0 0
        %1061 = vmatprep.mubr.bf16.mxu0 0
        %1062 = vmatmul.mubr.bf16.gmra.mrb[0].mxu0 %v979
        %v1063 = vpop.f32.mrb[0].mxu0
        %v1064 = vadd.f32 %v772, %v1063
        %v1065 = vpop.f32.mrb[0].mxu0
        %v1066 = vpop.f32.mrb[0].mxu0
        %v1067 = vadd.f32 %v775, %v1066
        %v1068 = vpop.f32.mrb[0].mxu0
        %1069 = vmatprep.mubr.bf16.mxu0 0
        %1070 = vmatmul.mubr.bf16.gmra.mrb[0].mxu0 %v982
        %v1071 = vpop.f32.mrb[0].mxu0
        %v1072 = vadd.f32 %v780, %v1071
        %v1073 = vpop.f32.mrb[0].mxu0
        %v1074 = vpop.f32.mrb[0].mxu0
        %v1075 = vadd.f32 %v783, %v1074
        %v1076 = vpop.f32.mrb[0].mxu0
        %1077 = vmatprep.mubr.bf16.mxu0 0
        %1078 = vmatmul.mubr.bf16.gmra.mrb[0].mxu0 %v985
        %v1079 = vpop.f32.mrb[0].mxu0
        %v1080 = vadd.f32 %v788, %v1079
        %v1081 = vpop.f32.mrb[0].mxu0
        %v1082 = vpop.f32.mrb[0].mxu0
        %v1083 = vadd.f32 %v791, %v1082
        %v1084 = vpop.f32.mrb[0].mxu0
        %1085 = vmatprep.mubr.bf16.mxu0 0
        %1086 = vmatmul.mubr.bf16.gmra.mrb[0].mxu0 %v988
        %v1087 = vpop.f32.mrb[0].mxu0
        %v1088 = vadd.f32 %v796, %v1087
        %v1089 = vpop.f32.mrb[0].mxu0
        %v1090 = vpop.f32.mrb[0].mxu0
        %v1091 = vadd.f32 %v799, %v1090
        %v1092 = vpop.f32.mrb[0].mxu0
        %1093 = vmatprep.mubr.bf16.mxu0 0
        %1094 = vmatmul.mubr.bf16.gmra.mrb[0].mxu0 %v991
        %v1095 = vpop.f32.mrb[0].mxu0
        %v1096 = vadd.f32 %v804, %v1095
        %v1097 = vpop.f32.mrb[0].mxu0
        %v1098 = vpop.f32.mrb[0].mxu0
        %v1099 = vadd.f32 %v807, %v1098
        %v1100 = vpop.f32.mrb[0].mxu0
        %1101 = vmatprep.mubr.bf16.mxu0 0
        %1102 = vmatmul.mubr.bf16.gmra.mrb[0].mxu0 %v994
        %v1103 = vpop.f32.mrb[0].mxu0
        %v1104 = vadd.f32 %v812, %v1103
        %v1105 = vpop.f32.mrb[0].mxu0
        %v1106 = vpop.f32.mrb[0].mxu0
        %v1107 = vadd.f32 %v815, %v1106
        %v1108 = vpop.f32.mrb[0].mxu0
        %1109 = vmatprep.mubr.bf16.mxu0 0
        %1110 = vmatmul.mubr.bf16.gmra.mrb[0].mxu0 %v997
        %v1111 = vpop.f32.mrb[0].mxu0
        %v1112 = vadd.f32 %v820, %v1111
        %v1113 = vpop.f32.mrb[0].mxu0
        %v1114 = vpop.f32.mrb[0].mxu0
        %v1115 = vadd.f32 %v823, %v1114
        %v1116 = vpop.f32.mrb[0].mxu0
        %1117 = vmatprep.mubr.bf16.mxu0 0
        %1118 = vmatmul.mubr.bf16.gmra.mrb[0].mxu0 %v1000
        %v1119 = vpop.f32.mrb[0].mxu0
        %v1120 = vadd.f32 %v828, %v1119
        %v1121 = vpop.f32.mrb[0].mxu0
        %v1122 = vpop.f32.mrb[0].mxu0
        %v1123 = vadd.f32 %v831, %v1122
        %v1124 = vpop.f32.mrb[0].mxu0
        %1125 = vmatprep.mubr.bf16.mxu0 0
        %1126 = vmatmul.mubr.bf16.gmra.mrb[0].mxu0 %v1003
        %v1127 = vpop.f32.mrb[0].mxu0
        %v1128 = vadd.f32 %v836, %v1127
        %v1129 = vpop.f32.mrb[0].mxu0
        %v1130 = vpop.f32.mrb[0].mxu0
        %v1131 = vadd.f32 %v839, %v1130
        %v1132 = vpop.f32.mrb[0].mxu0
        %1133 = vmatprep.mubr.bf16.mxu0 0
        %1134 = vmatmul.mubr.bf16.gmra.mrb[0].mxu0 %v1006
        %v1135 = vpop.f32.mrb[0].mxu0
        %v1136 = vadd.f32 %v844, %v1135
        %v1137 = vpop.f32.mrb[0].mxu0
        %v1138 = vpop.f32.mrb[0].mxu0
        %v1139 = vadd.f32 %v847, %v1138
        %v1140 = vpop.f32.mrb[0].mxu0
        %1141 = vmatprep.mubr.bf16.mxu0 0
        %1142 = vmatmul.mubr.bf16.gmra.mrb[0].mxu0 %v1009
        %v1143 = vpop.f32.mrb[0].mxu0
        %v1144 = vadd.f32 %v852, %v1143
        %v1145 = vpop.f32.mrb[0].mxu0
        %v1146 = vpop.f32.mrb[0].mxu0
        %v1147 = vadd.f32 %v855, %v1146
        %v1148 = vpop.f32.mrb[0].mxu0
        %1149 = vmatprep.mubr.bf16.mxu0 0
        %1150 = vmatmul.mubr.bf16.gmra.mrb[0].mxu0 %v1012
        %v1151 = vpop.f32.mrb[0].mxu0
        %v1152 = vadd.f32 %v860, %v1151
        %v1153 = vpop.f32.mrb[0].mxu0
        %v1154 = vpop.f32.mrb[0].mxu0
        %v1155 = vadd.f32 %v863, %v1154
        %v1156 = vpop.f32.mrb[0].mxu0
        %1157 = vmatprep.mubr.bf16.mxu0 0
        %1158 = vmatmul.mubr.bf16.gmra.mrb[0].mxu0 %v1015
        %v1159 = vpop.f32.mrb[0].mxu0
        %v1160 = vadd.f32 %v868, %v1159
        %v1161 = vpop.f32.mrb[0].mxu0
        %v1162 = vpop.f32.mrb[0].mxu0
        %v1163 = vadd.f32 %v871, %v1162
        %v1164 = vpop.f32.mrb[0].mxu0
        %1165 = vmatprep.mubr.bf16.mxu0 0
        %1166 = vmatmul.mubr.bf16.gmra.mrb[0].mxu0 %v1018
        %v1167 = vpop.f32.mrb[0].mxu0
        %v1168 = vadd.f32 %v876, %v1167
        %v1169 = vpop.f32.mrb[0].mxu0
        %v1170 = vpop.f32.mrb[0].mxu0
        %v1171 = vadd.f32 %v879, %v1170
        %v1172 = vpop.f32.mrb[0].mxu0
        %1173 = vmatprep.mubr.bf16.mxu0 0
        %1174 = vmatmul.mubr.bf16.gmra.mrb[0].mxu0 %v1021
        %v1175 = vpop.f32.mrb[0].mxu0
        %v1176 = vadd.f32 %v884, %v1175
        %v1177 = vpop.f32.mrb[0].mxu0
        %v1178 = vpop.f32.mrb[0].mxu0
        %v1179 = vadd.f32 %v887, %v1178
        %v1180 = vpop.f32.mrb[0].mxu0
        %1181 = vmatprep.mubr.bf16.mxu0 0
        %1182 = vmatmul.mubr.bf16.gmra.mrb[0].mxu0 %v1024
        %v1183 = vpop.f32.mrb[0].mxu0
        %v1184 = vadd.f32 %v892, %v1183
        %v1185 = vpop.f32.mrb[0].mxu0
        %v1186 = vpop.f32.mrb[0].mxu0
        %v1187 = vadd.f32 %v895, %v1186
        %v1188 = vpop.f32.mrb[0].mxu0
        %1189 = vdwg.mxu0
        %vm1206 = vcmask 1042432
        %vm1207 = vcmask 1046532
        %vm1208 = vmor %vm1206, %vm1207
        %v1209 = vrot.slane %v192, 5
        %v1210 = vrot.slane %v1209, 4
        %v1211 = vrot.slane %v193, 5
        %v1212 = vsel %vm1208, %v1210, %v1211
        %v1213 = vrot.slane %v1211, 4
        %v1214 = vrot.slane %v194, 5
        %v1215 = vsel %vm1208, %v1213, %v1214
        %v1216 = vrot.slane %v195, 5
        %v1217 = vrot.slane %v1216, 4
        %v1218 = vrot.slane %v196, 5
        %v1219 = vsel %vm1208, %v1217, %v1218
        %v1220 = vrot.slane %v1218, 4
        %v1221 = vrot.slane %v197, 5
        %v1222 = vsel %vm1208, %v1220, %v1221
        %v1223 = vrot.slane %v198, 5
        %v1224 = vrot.slane %v1223, 4
        %v1225 = vrot.slane %v199, 5
        %v1226 = vsel %vm1208, %v1224, %v1225
        %v1227 = vrot.slane %v1225, 4
        %v1228 = vrot.slane %v200, 5
        %v1229 = vsel %vm1208, %v1227, %v1228
        %v1230 = vrot.slane %v201, 5
        %v1231 = vrot.slane %v1230, 4
        %v1232 = vrot.slane %v202, 5
        %v1233 = vsel %vm1208, %v1231, %v1232
        %v1234 = vrot.slane %v1232, 4
        %v1235 = vrot.slane %v203, 5
        %v1236 = vsel %vm1208, %v1234, %v1235
        %v1237 = vrot.slane %v204, 5
        %v1238 = vrot.slane %v1237, 4
        %v1239 = vrot.slane %v205, 5
        %v1240 = vsel %vm1208, %v1238, %v1239
        %v1241 = vrot.slane %v1239, 4
        %v1242 = vrot.slane %v206, 5
        %v1243 = vsel %vm1208, %v1241, %v1242
        %v1244 = vrot.slane %v207, 5
        %v1245 = vrot.slane %v1244, 4
        %v1246 = vrot.slane %v208, 5
        %v1247 = vsel %vm1208, %v1245, %v1246
        %v1248 = vrot.slane %v1246, 4
        %v1249 = vrot.slane %v209, 5
        %v1250 = vsel %vm1208, %v1248, %v1249
        %v1251 = vrot.slane %v210, 5
        %v1252 = vrot.slane %v1251, 4
        %v1253 = vrot.slane %v211, 5
        %v1254 = vsel %vm1208, %v1252, %v1253
        %v1255 = vrot.slane %v1253, 4
        %v1256 = vrot.slane %v212, 5
        %v1257 = vsel %vm1208, %v1255, %v1256
        %v1258 = vrot.slane %v213, 5
        %v1259 = vrot.slane %v1258, 4
        %v1260 = vrot.slane %v214, 5
        %v1261 = vsel %vm1208, %v1259, %v1260
        %v1262 = vrot.slane %v1260, 4
        %v1263 = vrot.slane %v215, 5
        %v1264 = vsel %vm1208, %v1262, %v1263
        %v1265 = vrot.slane %v216, 5
        %v1266 = vrot.slane %v1265, 4
        %v1267 = vrot.slane %v217, 5
        %v1268 = vsel %vm1208, %v1266, %v1267
        %v1269 = vrot.slane %v1267, 4
        %v1270 = vrot.slane %v218, 5
        %v1271 = vsel %vm1208, %v1269, %v1270
        %v1272 = vrot.slane %v219, 5
        %v1273 = vrot.slane %v1272, 4
        %v1274 = vrot.slane %v220, 5
        %v1275 = vsel %vm1208, %v1273, %v1274
        %v1276 = vrot.slane %v1274, 4
        %v1277 = vrot.slane %v221, 5
        %v1278 = vsel %vm1208, %v1276, %v1277
        %v1279 = vrot.slane %v222, 5
        %v1280 = vrot.slane %v1279, 4
        %v1281 = vrot.slane %v223, 5
        %v1282 = vsel %vm1208, %v1280, %v1281
        %v1283 = vrot.slane %v1281, 4
        %v1284 = vrot.slane %v224, 5
        %v1285 = vsel %vm1208, %v1283, %v1284
        %v1286 = vrot.slane %v225, 5
        %v1287 = vrot.slane %v1286, 4
        %v1288 = vrot.slane %v226, 5
        %v1289 = vsel %vm1208, %v1287, %v1288
        %v1290 = vrot.slane %v1288, 4
        %v1291 = vrot.slane %v227, 5
        %v1292 = vsel %vm1208, %v1290, %v1291
        %v1293 = vrot.slane %v228, 5
        %v1294 = vrot.slane %v1293, 4
        %v1295 = vrot.slane %v229, 5
        %v1296 = vsel %vm1208, %v1294, %v1295
        %v1297 = vrot.slane %v1295, 4
        %v1298 = vrot.slane %v230, 5
        %v1299 = vsel %vm1208, %v1297, %v1298
        %v1300 = vrot.slane %v231, 5
        %v1301 = vrot.slane %v1300, 4
        %v1302 = vrot.slane %v232, 5
        %v1303 = vsel %vm1208, %v1301, %v1302
        %v1304 = vrot.slane %v1302, 4
        %v1305 = vrot.slane %v233, 5
        %v1306 = vsel %vm1208, %v1304, %v1305
        %v1307 = vrot.slane %v234, 5
        %v1308 = vrot.slane %v1307, 4
        %v1309 = vrot.slane %v235, 5
        %v1310 = vsel %vm1208, %v1308, %v1309
        %v1311 = vrot.slane %v1309, 4
        %v1312 = vrot.slane %v236, 5
        %v1313 = vsel %vm1208, %v1311, %v1312
        %v1314 = vrot.slane %v237, 5
        %v1315 = vrot.slane %v1314, 4
        %v1316 = vrot.slane %v238, 5
        %v1317 = vsel %vm1208, %v1315, %v1316
        %v1318 = vrot.slane %v1316, 4
        %v1319 = vrot.slane %v239, 5
        %v1320 = vsel %vm1208, %v1318, %v1319
        %s1321 = scalar_lea.vmem %s1, 4
        %v1322 = vld [vmem:[%s1321] sm:$0x3]
        %v1323 = vunpack.c.l.b16 %v1212
        %v1324 = vunpack.c.l.b16 %v1215
        %v1325 = vunpack.c.l.b16 %v1219
        %v1326 = vunpack.c.l.b16 %v1222
        %v1327 = vunpack.c.l.b16 %v1226
        %v1328 = vunpack.c.l.b16 %v1229
        %v1329 = vunpack.c.l.b16 %v1233
        %v1330 = vunpack.c.l.b16 %v1236
        %v1331 = vunpack.c.l.b16 %v1240
        %v1332 = vunpack.c.l.b16 %v1243
        %v1333 = vunpack.c.l.b16 %v1247
        %v1334 = vunpack.c.l.b16 %v1250
        %v1335 = vunpack.c.l.b16 %v1254
        %v1336 = vunpack.c.l.b16 %v1257
        %v1337 = vunpack.c.l.b16 %v1261
        %v1338 = vunpack.c.l.b16 %v1264
        %v1339 = vunpack.c.l.b16 %v1268
        %v1340 = vunpack.c.l.b16 %v1271
        %v1341 = vunpack.c.l.b16 %v1275
        %v1342 = vunpack.c.l.b16 %v1278
        %v1343 = vunpack.c.l.b16 %v1282
        %v1344 = vunpack.c.l.b16 %v1285
        %v1345 = vunpack.c.l.b16 %v1289
        %v1346 = vunpack.c.l.b16 %v1292
        %v1347 = vunpack.c.l.b16 %v1296
        %v1348 = vunpack.c.l.b16 %v1299
        %v1349 = vunpack.c.l.b16 %v1303
        %v1350 = vunpack.c.l.b16 %v1306
        %v1351 = vunpack.c.l.b16 %v1310
        %v1352 = vunpack.c.l.b16 %v1313
        %v1353 = vunpack.c.l.b16 %v1317
        %v1354 = vunpack.c.l.b16 %v1320
        %v1355 = vpack.c.b16 %v1324, %v1323
        %v1356 = vpack.c.b16 %v1326, %v1325
        %v1357 = vpack.c.b16 %v1328, %v1327
        %v1358 = vpack.c.b16 %v1330, %v1329
        %v1359 = vpack.c.b16 %v1332, %v1331
        %v1360 = vpack.c.b16 %v1334, %v1333
        %v1361 = vpack.c.b16 %v1336, %v1335
        %v1362 = vpack.c.b16 %v1338, %v1337
        %v1363 = vpack.c.b16 %v1340, %v1339
        %v1364 = vpack.c.b16 %v1342, %v1341
        %v1365 = vpack.c.b16 %v1344, %v1343
        %v1366 = vpack.c.b16 %v1346, %v1345
        %v1367 = vpack.c.b16 %v1348, %v1347
        %v1368 = vpack.c.b16 %v1350, %v1349
        %v1369 = vpack.c.b16 %v1352, %v1351
        %v1370 = vpack.c.b16 %v1354, %v1353
        %v1372 = vsel %vm684, %v1355, 0
        %v1375 = vsel %vm684, %v1356, 0
        %v1378 = vsel %vm684, %v1357, 0
        %v1381 = vsel %vm684, %v1358, 0
        %v1384 = vsel %vm684, %v1359, 0
        %v1387 = vsel %vm684, %v1360, 0
        %v1390 = vsel %vm684, %v1361, 0
        %v1393 = vsel %vm684, %v1362, 0
        %v1396 = vsel %vm684, %v1363, 0
        %v1399 = vsel %vm684, %v1364, 0
        %v1402 = vsel %vm684, %v1365, 0
        %v1405 = vsel %vm684, %v1366, 0
        %v1408 = vsel %vm684, %v1367, 0
        %v1411 = vsel %vm684, %v1368, 0
        %v1414 = vsel %vm684, %v1369, 0
        %v1417 = vsel %vm684, %v1370, 0
        %v1420 = vsel %vm733, %v1322, 0
        %1422 = vmatprep.subr.bf16.mxu0 0
        %1423 = vmatpush1.bf16.msra.mxu0 %v1420
        %1424 = vmatprep.subr.bf16.mxu0 0
        %1425 = vmatpush1.bf16.msra.mxu0 0
        %1426 = vmatprep.subr.bf16.mxu0 0
        %1427 = vmatpush1.bf16.msra.mxu0 0
        %1428 = vmatprep.subr.bf16.mxu0 0
        %1429 = vmatpush1.bf16.msra.mxu0 0
        %1430 = vmatprep.subr.bf16.mxu0 0
        %1431 = vmatpush1.bf16.msra.mxu0 0
        %1432 = vmatprep.subr.bf16.mxu0 0
        %1433 = vmatpush1.bf16.msra.mxu0 0
        %1434 = vmatprep.subr.bf16.mxu0 0
        %1435 = vmatpush1.bf16.msra.mxu0 0
        %1436 = vmatprep.subr.bf16.mxu0 0
        %1437 = vmatpush1.bf16.msra.mxu0 0
        %1438 = vmatprep.subr.bf16.mxu0 0
        %1439 = vmatpush1.bf16.msra.mxu0 0
        %1440 = vmatprep.subr.bf16.mxu0 0
        %1441 = vmatpush1.bf16.msra.mxu0 0
        %1442 = vmatprep.subr.bf16.mxu0 0
        %1443 = vmatpush1.bf16.msra.mxu0 0
        %1444 = vmatprep.subr.bf16.mxu0 0
        %1445 = vmatpush1.bf16.msra.mxu0 0
        %1446 = vmatprep.subr.bf16.mxu0 0
        %1447 = vmatpush1.bf16.msra.mxu0 0
        %1448 = vmatprep.subr.bf16.mxu0 0
        %1449 = vmatpush1.bf16.msra.mxu0 0
        %1450 = vmatprep.subr.bf16.mxu0 0
        %1451 = vmatpush1.bf16.msra.mxu0 0
        %1452 = vmatprep.subr.bf16.mxu0 0
        %1453 = vmatpush1.bf16.msra.mxu0 0
        %1454 = vmatprep.mubr.bf16.mxu0 0
        %1455 = vmatmul.mubr.bf16.gmra.mrb[0].mxu0 %v1372
        %v1456 = vpop.f32.mrb[0].mxu0
        %v1457 = vadd.f32 0.0, %v1456
        %v1458 = vpop.f32.mrb[0].mxu0
        %v1459 = vpop.f32.mrb[0].mxu0
        %v1460 = vadd.f32 0.0, %v1459
        %v1461 = vpop.f32.mrb[0].mxu0
        %1462 = vmatprep.mubr.bf16.mxu0 0
        %1463 = vmatmul.mubr.bf16.gmra.mrb[0].mxu0 %v1375
        %v1464 = vpop.f32.mrb[0].mxu0
        %v1465 = vadd.f32 0.0, %v1464
        %v1466 = vpop.f32.mrb[0].mxu0
        %v1467 = vpop.f32.mrb[0].mxu0
        %v1468 = vadd.f32 0.0, %v1467
        %v1469 = vpop.f32.mrb[0].mxu0
        %1470 = vmatprep.mubr.bf16.mxu0 0
        %1471 = vmatmul.mubr.bf16.gmra.mrb[0].mxu0 %v1378
        %v1472 = vpop.f32.mrb[0].mxu0
        %v1473 = vadd.f32 0.0, %v1472
        %v1474 = vpop.f32.mrb[0].mxu0
        %v1475 = vpop.f32.mrb[0].mxu0
        %v1476 = vadd.f32 0.0, %v1475
        %v1477 = vpop.f32.mrb[0].mxu0
        %1478 = vmatprep.mubr.bf16.mxu0 0
        %1479 = vmatmul.mubr.bf16.gmra.mrb[0].mxu0 %v1381
        %v1480 = vpop.f32.mrb[0].mxu0
        %v1481 = vadd.f32 0.0, %v1480
        %v1482 = vpop.f32.mrb[0].mxu0
        %v1483 = vpop.f32.mrb[0].mxu0
        %v1484 = vadd.f32 0.0, %v1483
        %v1485 = vpop.f32.mrb[0].mxu0
        %1486 = vmatprep.mubr.bf16.mxu0 0
        %1487 = vmatmul.mubr.bf16.gmra.mrb[0].mxu0 %v1384
        %v1488 = vpop.f32.mrb[0].mxu0
        %v1489 = vadd.f32 0.0, %v1488
        %v1490 = vpop.f32.mrb[0].mxu0
        %v1491 = vpop.f32.mrb[0].mxu0
        %v1492 = vadd.f32 0.0, %v1491
        %v1493 = vpop.f32.mrb[0].mxu0
        %1494 = vmatprep.mubr.bf16.mxu0 0
        %1495 = vmatmul.mubr.bf16.gmra.mrb[0].mxu0 %v1387
        %v1496 = vpop.f32.mrb[0].mxu0
        %v1497 = vadd.f32 0.0, %v1496
        %v1498 = vpop.f32.mrb[0].mxu0
        %v1499 = vpop.f32.mrb[0].mxu0
        %v1500 = vadd.f32 0.0, %v1499
        %v1501 = vpop.f32.mrb[0].mxu0
        %1502 = vmatprep.mubr.bf16.mxu0 0
        %1503 = vmatmul.mubr.bf16.gmra.mrb[0].mxu0 %v1390
        %v1504 = vpop.f32.mrb[0].mxu0
        %v1505 = vadd.f32 0.0, %v1504
        %v1506 = vpop.f32.mrb[0].mxu0
        %v1507 = vpop.f32.mrb[0].mxu0
        %v1508 = vadd.f32 0.0, %v1507
        %v1509 = vpop.f32.mrb[0].mxu0
        %1510 = vmatprep.mubr.bf16.mxu0 0
        %1511 = vmatmul.mubr.bf16.gmra.mrb[0].mxu0 %v1393
        %v1512 = vpop.f32.mrb[0].mxu0
        %v1513 = vadd.f32 0.0, %v1512
        %v1514 = vpop.f32.mrb[0].mxu0
        %v1515 = vpop.f32.mrb[0].mxu0
        %v1516 = vadd.f32 0.0, %v1515
        %v1517 = vpop.f32.mrb[0].mxu0
        %1518 = vmatprep.mubr.bf16.mxu0 0
        %1519 = vmatmul.mubr.bf16.gmra.mrb[0].mxu0 %v1396
        %v1520 = vpop.f32.mrb[0].mxu0
        %v1521 = vadd.f32 0.0, %v1520
        %v1522 = vpop.f32.mrb[0].mxu0
        %v1523 = vpop.f32.mrb[0].mxu0
        %v1524 = vadd.f32 0.0, %v1523
        %v1525 = vpop.f32.mrb[0].mxu0
        %1526 = vmatprep.mubr.bf16.mxu0 0
        %1527 = vmatmul.mubr.bf16.gmra.mrb[0].mxu0 %v1399
        %v1528 = vpop.f32.mrb[0].mxu0
        %v1529 = vadd.f32 0.0, %v1528
        %v1530 = vpop.f32.mrb[0].mxu0
        %v1531 = vpop.f32.mrb[0].mxu0
        %v1532 = vadd.f32 0.0, %v1531
        %v1533 = vpop.f32.mrb[0].mxu0
        %1534 = vmatprep.mubr.bf16.mxu0 0
        %1535 = vmatmul.mubr.bf16.gmra.mrb[0].mxu0 %v1402
        %v1536 = vpop.f32.mrb[0].mxu0
        %v1537 = vadd.f32 0.0, %v1536
        %v1538 = vpop.f32.mrb[0].mxu0
        %v1539 = vpop.f32.mrb[0].mxu0
        %v1540 = vadd.f32 0.0, %v1539
        %v1541 = vpop.f32.mrb[0].mxu0
        %1542 = vmatprep.mubr.bf16.mxu0 0
        %1543 = vmatmul.mubr.bf16.gmra.mrb[0].mxu0 %v1405
        %v1544 = vpop.f32.mrb[0].mxu0
        %v1545 = vadd.f32 0.0, %v1544
        %v1546 = vpop.f32.mrb[0].mxu0
        %v1547 = vpop.f32.mrb[0].mxu0
        %v1548 = vadd.f32 0.0, %v1547
        %v1549 = vpop.f32.mrb[0].mxu0
        %1550 = vmatprep.mubr.bf16.mxu0 0
        %1551 = vmatmul.mubr.bf16.gmra.mrb[0].mxu0 %v1408
        %v1552 = vpop.f32.mrb[0].mxu0
        %v1553 = vadd.f32 0.0, %v1552
        %v1554 = vpop.f32.mrb[0].mxu0
        %v1555 = vpop.f32.mrb[0].mxu0
        %v1556 = vadd.f32 0.0, %v1555
        %v1557 = vpop.f32.mrb[0].mxu0
        %1558 = vmatprep.mubr.bf16.mxu0 0
        %1559 = vmatmul.mubr.bf16.gmra.mrb[0].mxu0 %v1411
        %v1560 = vpop.f32.mrb[0].mxu0
        %v1561 = vadd.f32 0.0, %v1560
        %v1562 = vpop.f32.mrb[0].mxu0
        %v1563 = vpop.f32.mrb[0].mxu0
        %v1564 = vadd.f32 0.0, %v1563
        %v1565 = vpop.f32.mrb[0].mxu0
        %1566 = vmatprep.mubr.bf16.mxu0 0
        %1567 = vmatmul.mubr.bf16.gmra.mrb[0].mxu0 %v1414
        %v1568 = vpop.f32.mrb[0].mxu0
        %v1569 = vadd.f32 0.0, %v1568
        %v1570 = vpop.f32.mrb[0].mxu0
        %v1571 = vpop.f32.mrb[0].mxu0
        %v1572 = vadd.f32 0.0, %v1571
        %v1573 = vpop.f32.mrb[0].mxu0
        %1574 = vmatprep.mubr.bf16.mxu0 0
        %1575 = vmatmul.mubr.bf16.gmra.mrb[0].mxu0 %v1417
        %v1576 = vpop.f32.mrb[0].mxu0
        %v1577 = vadd.f32 0.0, %v1576
        %v1578 = vpop.f32.mrb[0].mxu0
        %v1579 = vpop.f32.mrb[0].mxu0
        %v1580 = vadd.f32 0.0, %v1579
        %v1581 = vpop.f32.mrb[0].mxu0
        %1582 = vdwg.mxu0
        %v1583 = vadd.f32 %v1064, %v1457
        %v1584 = vadd.f32 %v1067, %v1460
        %v1585 = vadd.f32 %v1072, %v1465
        %v1586 = vadd.f32 %v1075, %v1468
        %v1587 = vadd.f32 %v1080, %v1473
        %v1588 = vadd.f32 %v1083, %v1476
        %v1589 = vadd.f32 %v1088, %v1481
        %v1590 = vadd.f32 %v1091, %v1484
        %v1591 = vadd.f32 %v1096, %v1489
        %v1592 = vadd.f32 %v1099, %v1492
        %v1593 = vadd.f32 %v1104, %v1497
        %v1594 = vadd.f32 %v1107, %v1500
        %v1595 = vadd.f32 %v1112, %v1505
        %v1596 = vadd.f32 %v1115, %v1508
        %v1597 = vadd.f32 %v1120, %v1513
        %v1598 = vadd.f32 %v1123, %v1516
        %v1599 = vadd.f32 %v1128, %v1521
        %v1600 = vadd.f32 %v1131, %v1524
        %v1601 = vadd.f32 %v1136, %v1529
        %v1602 = vadd.f32 %v1139, %v1532
        %v1603 = vadd.f32 %v1144, %v1537
        %v1604 = vadd.f32 %v1147, %v1540
        %v1605 = vadd.f32 %v1152, %v1545
        %v1606 = vadd.f32 %v1155, %v1548
        %v1607 = vadd.f32 %v1160, %v1553
        %v1608 = vadd.f32 %v1163, %v1556
        %v1609 = vadd.f32 %v1168, %v1561
        %v1610 = vadd.f32 %v1171, %v1564
        %v1611 = vadd.f32 %v1176, %v1569
        %v1612 = vadd.f32 %v1179, %v1572
        %v1613 = vadd.f32 %v1184, %v1577
        %v1614 = vadd.f32 %v1187, %v1580
        %s1615 = scalar_lea.vmem %s1, 6
        %v1616 = vld [vmem:[%s1615] sm:$0x3]
        %v1619 = vunpack.c.l.b16 %v240
        %v1620 = vunpack.c.l.b16 %v241
        %v1621 = vpack.c.b16 %v1620, %v1619
        %v1623 = vsel %vm684, %v1621, 0
        %v1626 = vsel %vm733, %v1616, 0
        %1628 = vmatprep.subr.bf16.mxu0 0
        %1629 = vmatpush1.bf16.msra.mxu0 %v1626
        %1630 = vmatprep.subr.bf16.mxu0 0
        %1631 = vmatpush1.bf16.msra.mxu0 0
        %1632 = vmatprep.subr.bf16.mxu0 0
        %1633 = vmatpush1.bf16.msra.mxu0 0
        %1634 = vmatprep.subr.bf16.mxu0 0
        %1635 = vmatpush1.bf16.msra.mxu0 0
        %1636 = vmatprep.subr.bf16.mxu0 0
        %1637 = vmatpush1.bf16.msra.mxu0 0
        %1638 = vmatprep.subr.bf16.mxu0 0
        %1639 = vmatpush1.bf16.msra.mxu0 0
        %1640 = vmatprep.subr.bf16.mxu0 0
        %1641 = vmatpush1.bf16.msra.mxu0 0
        %1642 = vmatprep.subr.bf16.mxu0 0
        %1643 = vmatpush1.bf16.msra.mxu0 0
        %1644 = vmatprep.subr.bf16.mxu0 0
        %1645 = vmatpush1.bf16.msra.mxu0 0
        %1646 = vmatprep.subr.bf16.mxu0 0
        %1647 = vmatpush1.bf16.msra.mxu0 0
        %1648 = vmatprep.subr.bf16.mxu0 0
        %1649 = vmatpush1.bf16.msra.mxu0 0
        %1650 = vmatprep.subr.bf16.mxu0 0
        %1651 = vmatpush1.bf16.msra.mxu0 0
        %1652 = vmatprep.subr.bf16.mxu0 0
        %1653 = vmatpush1.bf16.msra.mxu0 0
        %1654 = vmatprep.subr.bf16.mxu0 0
        %1655 = vmatpush1.bf16.msra.mxu0 0
        %1656 = vmatprep.subr.bf16.mxu0 0
        %1657 = vmatpush1.bf16.msra.mxu0 0
        %1658 = vmatprep.subr.bf16.mxu0 0
        %1659 = vmatpush1.bf16.msra.mxu0 0
        %1660 = vmatprep.mubr.bf16.mxu0 0
        %1661 = vmatmul.mubr.bf16.gmra.mrb[0].mxu0 %v982
        %v1662 = vpop.f32.mrb[0].mxu0
        %v1663 = vadd.f32 0.0, %v1662
        %v1664 = vpop.f32.mrb[0].mxu0
        %v1665 = vpop.f32.mrb[0].mxu0
        %v1666 = vadd.f32 0.0, %v1665
        %v1667 = vpop.f32.mrb[0].mxu0
        %1668 = vmatprep.mubr.bf16.mxu0 0
        %1669 = vmatmul.mubr.bf16.gmra.mrb[0].mxu0 %v985
        %v1670 = vpop.f32.mrb[0].mxu0
        %v1671 = vadd.f32 0.0, %v1670
        %v1672 = vpop.f32.mrb[0].mxu0
        %v1673 = vpop.f32.mrb[0].mxu0
        %v1674 = vadd.f32 0.0, %v1673
        %v1675 = vpop.f32.mrb[0].mxu0
        %1676 = vmatprep.mubr.bf16.mxu0 0
        %1677 = vmatmul.mubr.bf16.gmra.mrb[0].mxu0 %v988
        %v1678 = vpop.f32.mrb[0].mxu0
        %v1679 = vadd.f32 0.0, %v1678
        %v1680 = vpop.f32.mrb[0].mxu0
        %v1681 = vpop.f32.mrb[0].mxu0
        %v1682 = vadd.f32 0.0, %v1681
        %v1683 = vpop.f32.mrb[0].mxu0
        %1684 = vmatprep.mubr.bf16.mxu0 0
        %1685 = vmatmul.mubr.bf16.gmra.mrb[0].mxu0 %v991
        %v1686 = vpop.f32.mrb[0].mxu0
        %v1687 = vadd.f32 0.0, %v1686
        %v1688 = vpop.f32.mrb[0].mxu0
        %v1689 = vpop.f32.mrb[0].mxu0
        %v1690 = vadd.f32 0.0, %v1689
        %v1691 = vpop.f32.mrb[0].mxu0
        %1692 = vmatprep.mubr.bf16.mxu0 0
        %1693 = vmatmul.mubr.bf16.gmra.mrb[0].mxu0 %v994
        %v1694 = vpop.f32.mrb[0].mxu0
        %v1695 = vadd.f32 0.0, %v1694
        %v1696 = vpop.f32.mrb[0].mxu0
        %v1697 = vpop.f32.mrb[0].mxu0
        %v1698 = vadd.f32 0.0, %v1697
        %v1699 = vpop.f32.mrb[0].mxu0
        %1700 = vmatprep.mubr.bf16.mxu0 0
        %1701 = vmatmul.mubr.bf16.gmra.mrb[0].mxu0 %v997
        %v1702 = vpop.f32.mrb[0].mxu0
        %v1703 = vadd.f32 0.0, %v1702
        %v1704 = vpop.f32.mrb[0].mxu0
        %v1705 = vpop.f32.mrb[0].mxu0
        %v1706 = vadd.f32 0.0, %v1705
        %v1707 = vpop.f32.mrb[0].mxu0
        %1708 = vmatprep.mubr.bf16.mxu0 0
        %1709 = vmatmul.mubr.bf16.gmra.mrb[0].mxu0 %v1000
        %v1710 = vpop.f32.mrb[0].mxu0
        %v1711 = vadd.f32 0.0, %v1710
        %v1712 = vpop.f32.mrb[0].mxu0
        %v1713 = vpop.f32.mrb[0].mxu0
        %v1714 = vadd.f32 0.0, %v1713
        %v1715 = vpop.f32.mrb[0].mxu0
        %1716 = vmatprep.mubr.bf16.mxu0 0
        %1717 = vmatmul.mubr.bf16.gmra.mrb[0].mxu0 %v1003
        %v1718 = vpop.f32.mrb[0].mxu0
        %v1719 = vadd.f32 0.0, %v1718
        %v1720 = vpop.f32.mrb[0].mxu0
        %v1721 = vpop.f32.mrb[0].mxu0
        %v1722 = vadd.f32 0.0, %v1721
        %v1723 = vpop.f32.mrb[0].mxu0
        %1724 = vmatprep.mubr.bf16.mxu0 0
        %1725 = vmatmul.mubr.bf16.gmra.mrb[0].mxu0 %v1006
        %v1726 = vpop.f32.mrb[0].mxu0
        %v1727 = vadd.f32 0.0, %v1726
        %v1728 = vpop.f32.mrb[0].mxu0
        %v1729 = vpop.f32.mrb[0].mxu0
        %v1730 = vadd.f32 0.0, %v1729
        %v1731 = vpop.f32.mrb[0].mxu0
        %1732 = vmatprep.mubr.bf16.mxu0 0
        %1733 = vmatmul.mubr.bf16.gmra.mrb[0].mxu0 %v1009
        %v1734 = vpop.f32.mrb[0].mxu0
        %v1735 = vadd.f32 0.0, %v1734
        %v1736 = vpop.f32.mrb[0].mxu0
        %v1737 = vpop.f32.mrb[0].mxu0
        %v1738 = vadd.f32 0.0, %v1737
        %v1739 = vpop.f32.mrb[0].mxu0
        %1740 = vmatprep.mubr.bf16.mxu0 0
        %1741 = vmatmul.mubr.bf16.gmra.mrb[0].mxu0 %v1012
        %v1742 = vpop.f32.mrb[0].mxu0
        %v1743 = vadd.f32 0.0, %v1742
        %v1744 = vpop.f32.mrb[0].mxu0
        %v1745 = vpop.f32.mrb[0].mxu0
        %v1746 = vadd.f32 0.0, %v1745
        %v1747 = vpop.f32.mrb[0].mxu0
        %1748 = vmatprep.mubr.bf16.mxu0 0
        %1749 = vmatmul.mubr.bf16.gmra.mrb[0].mxu0 %v1015
        %v1750 = vpop.f32.mrb[0].mxu0
        %v1751 = vadd.f32 0.0, %v1750
        %v1752 = vpop.f32.mrb[0].mxu0
        %v1753 = vpop.f32.mrb[0].mxu0
        %v1754 = vadd.f32 0.0, %v1753
        %v1755 = vpop.f32.mrb[0].mxu0
        %1756 = vmatprep.mubr.bf16.mxu0 0
        %1757 = vmatmul.mubr.bf16.gmra.mrb[0].mxu0 %v1018
        %v1758 = vpop.f32.mrb[0].mxu0
        %v1759 = vadd.f32 0.0, %v1758
        %v1760 = vpop.f32.mrb[0].mxu0
        %v1761 = vpop.f32.mrb[0].mxu0
        %v1762 = vadd.f32 0.0, %v1761
        %v1763 = vpop.f32.mrb[0].mxu0
        %1764 = vmatprep.mubr.bf16.mxu0 0
        %1765 = vmatmul.mubr.bf16.gmra.mrb[0].mxu0 %v1021
        %v1766 = vpop.f32.mrb[0].mxu0
        %v1767 = vadd.f32 0.0, %v1766
        %v1768 = vpop.f32.mrb[0].mxu0
        %v1769 = vpop.f32.mrb[0].mxu0
        %v1770 = vadd.f32 0.0, %v1769
        %v1771 = vpop.f32.mrb[0].mxu0
        %1772 = vmatprep.mubr.bf16.mxu0 0
        %1773 = vmatmul.mubr.bf16.gmra.mrb[0].mxu0 %v1024
        %v1774 = vpop.f32.mrb[0].mxu0
        %v1775 = vadd.f32 0.0, %v1774
        %v1776 = vpop.f32.mrb[0].mxu0
        %v1777 = vpop.f32.mrb[0].mxu0
        %v1778 = vadd.f32 0.0, %v1777
        %v1779 = vpop.f32.mrb[0].mxu0
        %1780 = vmatprep.mubr.bf16.mxu0 0
        %1781 = vmatmul.mubr.bf16.gmra.mrb[0].mxu0 %v1623
        %v1782 = vpop.f32.mrb[0].mxu0
        %v1783 = vadd.f32 0.0, %v1782
        %v1784 = vpop.f32.mrb[0].mxu0
        %v1785 = vpop.f32.mrb[0].mxu0
        %v1786 = vadd.f32 0.0, %v1785
        %v1787 = vpop.f32.mrb[0].mxu0
        %1788 = vdwg.mxu0
        %v1789 = vadd.f32 %v1583, %v1663
        %v1790 = vadd.f32 %v1584, %v1666
        %v1791 = vadd.f32 %v1585, %v1671
        %v1792 = vadd.f32 %v1586, %v1674
        %v1793 = vadd.f32 %v1587, %v1679
        %v1794 = vadd.f32 %v1588, %v1682
        %v1795 = vadd.f32 %v1589, %v1687
        %v1796 = vadd.f32 %v1590, %v1690
        %v1797 = vadd.f32 %v1591, %v1695
        %v1798 = vadd.f32 %v1592, %v1698
        %v1799 = vadd.f32 %v1593, %v1703
        %v1800 = vadd.f32 %v1594, %v1706
        %v1801 = vadd.f32 %v1595, %v1711
        %v1802 = vadd.f32 %v1596, %v1714
        %v1803 = vadd.f32 %v1597, %v1719
        %v1804 = vadd.f32 %v1598, %v1722
        %v1805 = vadd.f32 %v1599, %v1727
        %v1806 = vadd.f32 %v1600, %v1730
        %v1807 = vadd.f32 %v1601, %v1735
        %v1808 = vadd.f32 %v1602, %v1738
        %v1809 = vadd.f32 %v1603, %v1743
        %v1810 = vadd.f32 %v1604, %v1746
        %v1811 = vadd.f32 %v1605, %v1751
        %v1812 = vadd.f32 %v1606, %v1754
        %v1813 = vadd.f32 %v1607, %v1759
        %v1814 = vadd.f32 %v1608, %v1762
        %v1815 = vadd.f32 %v1609, %v1767
        %v1816 = vadd.f32 %v1610, %v1770
        %v1817 = vadd.f32 %v1611, %v1775
        %v1818 = vadd.f32 %v1612, %v1778
        %v1819 = vadd.f32 %v1613, %v1783
        %v1820 = vadd.f32 %v1614, %v1786
        %v1822 = vshrl.u32 %v240, 16
        %v1824 = vrot.slane %v1822, 4
        %v1825 = vshll.u32 %v240, 16
        %v1827 = vrot.slane %v1825, 5
        %v1828 = vor.u32 %v1824, %v1827
        %v1829 = vrot.slane %v1828, 4
        %v1831 = vshll.u32 %v241, 16
        %v1833 = vrot.slane %v1831, 5
        %v1834 = vsel %vm249, %v1829, %v1833
        %v1835 = vshrl.u32 %v241, 16
        %v1837 = vrot.slane %v1835, 4
        %v1838 = vor.u32 %v1837, %v1833
        %v1839 = vrot.slane %v1838, 4
        %v1841 = vshll.u32 %v242, 16
        %v1843 = vrot.slane %v1841, 5
        %v1844 = vsel %vm249, %v1839, %v1843
        %s1845 = scalar_lea.vmem %s1, 8
        %v1846 = vld [vmem:[%s1845] sm:$0x3]
        %v1847 = vunpack.c.l.b16 %v1834
        %v1848 = vunpack.c.l.b16 %v1844
        %v1849 = vpack.c.b16 %v1848, %v1847
        %v1851 = vsel %vm684, %v1849, 0
        %v1854 = vsel %vm733, %v1846, 0
        %1856 = vmatprep.subr.bf16.mxu0 0
        %1857 = vmatpush1.bf16.msra.mxu0 %v1854
        %1858 = vmatprep.subr.bf16.mxu0 0
        %1859 = vmatpush1.bf16.msra.mxu0 0
        %1860 = vmatprep.subr.bf16.mxu0 0
        %1861 = vmatpush1.bf16.msra.mxu0 0
        %1862 = vmatprep.subr.bf16.mxu0 0
        %1863 = vmatpush1.bf16.msra.mxu0 0
        %1864 = vmatprep.subr.bf16.mxu0 0
        %1865 = vmatpush1.bf16.msra.mxu0 0
        %1866 = vmatprep.subr.bf16.mxu0 0
        %1867 = vmatpush1.bf16.msra.mxu0 0
        %1868 = vmatprep.subr.bf16.mxu0 0
        %1869 = vmatpush1.bf16.msra.mxu0 0
        %1870 = vmatprep.subr.bf16.mxu0 0
        %1871 = vmatpush1.bf16.msra.mxu0 0
        %1872 = vmatprep.subr.bf16.mxu0 0
        %1873 = vmatpush1.bf16.msra.mxu0 0
        %1874 = vmatprep.subr.bf16.mxu0 0
        %1875 = vmatpush1.bf16.msra.mxu0 0
        %1876 = vmatprep.subr.bf16.mxu0 0
        %1877 = vmatpush1.bf16.msra.mxu0 0
        %1878 = vmatprep.subr.bf16.mxu0 0
        %1879 = vmatpush1.bf16.msra.mxu0 0
        %1880 = vmatprep.subr.bf16.mxu0 0
        %1881 = vmatpush1.bf16.msra.mxu0 0
        %1882 = vmatprep.subr.bf16.mxu0 0
        %1883 = vmatpush1.bf16.msra.mxu0 0
        %1884 = vmatprep.subr.bf16.mxu0 0
        %1885 = vmatpush1.bf16.msra.mxu0 0
        %1886 = vmatprep.subr.bf16.mxu0 0
        %1887 = vmatpush1.bf16.msra.mxu0 0
        %1888 = vmatprep.mubr.bf16.mxu0 0
        %1889 = vmatmul.mubr.bf16.gmra.mrb[0].mxu0 %v689
        %v1890 = vpop.f32.mrb[0].mxu0
        %v1891 = vadd.f32 0.0, %v1890
        %v1892 = vpop.f32.mrb[0].mxu0
        %v1893 = vpop.f32.mrb[0].mxu0
        %v1894 = vadd.f32 0.0, %v1893
        %v1895 = vpop.f32.mrb[0].mxu0
        %1896 = vmatprep.mubr.bf16.mxu0 0
        %1897 = vmatmul.mubr.bf16.gmra.mrb[0].mxu0 %v692
        %v1898 = vpop.f32.mrb[0].mxu0
        %v1899 = vadd.f32 0.0, %v1898
        %v1900 = vpop.f32.mrb[0].mxu0
        %v1901 = vpop.f32.mrb[0].mxu0
        %v1902 = vadd.f32 0.0, %v1901
        %v1903 = vpop.f32.mrb[0].mxu0
        %1904 = vmatprep.mubr.bf16.mxu0 0
        %1905 = vmatmul.mubr.bf16.gmra.mrb[0].mxu0 %v695
        %v1906 = vpop.f32.mrb[0].mxu0
        %v1907 = vadd.f32 0.0, %v1906
        %v1908 = vpop.f32.mrb[0].mxu0
        %v1909 = vpop.f32.mrb[0].mxu0
        %v1910 = vadd.f32 0.0, %v1909
        %v1911 = vpop.f32.mrb[0].mxu0
        %1912 = vmatprep.mubr.bf16.mxu0 0
        %1913 = vmatmul.mubr.bf16.gmra.mrb[0].mxu0 %v698
        %v1914 = vpop.f32.mrb[0].mxu0
        %v1915 = vadd.f32 0.0, %v1914
        %v1916 = vpop.f32.mrb[0].mxu0
        %v1917 = vpop.f32.mrb[0].mxu0
        %v1918 = vadd.f32 0.0, %v1917
        %v1919 = vpop.f32.mrb[0].mxu0
        %1920 = vmatprep.mubr.bf16.mxu0 0
        %1921 = vmatmul.mubr.bf16.gmra.mrb[0].mxu0 %v701
        %v1922 = vpop.f32.mrb[0].mxu0
        %v1923 = vadd.f32 0.0, %v1922
        %v1924 = vpop.f32.mrb[0].mxu0
        %v1925 = vpop.f32.mrb[0].mxu0
        %v1926 = vadd.f32 0.0, %v1925
        %v1927 = vpop.f32.mrb[0].mxu0
        %1928 = vmatprep.mubr.bf16.mxu0 0
        %1929 = vmatmul.mubr.bf16.gmra.mrb[0].mxu0 %v704
        %v1930 = vpop.f32.mrb[0].mxu0
        %v1931 = vadd.f32 0.0, %v1930
        %v1932 = vpop.f32.mrb[0].mxu0
        %v1933 = vpop.f32.mrb[0].mxu0
        %v1934 = vadd.f32 0.0, %v1933
        %v1935 = vpop.f32.mrb[0].mxu0
        %1936 = vmatprep.mubr.bf16.mxu0 0
        %1937 = vmatmul.mubr.bf16.gmra.mrb[0].mxu0 %v707
        %v1938 = vpop.f32.mrb[0].mxu0
        %v1939 = vadd.f32 0.0, %v1938
        %v1940 = vpop.f32.mrb[0].mxu0
        %v1941 = vpop.f32.mrb[0].mxu0
        %v1942 = vadd.f32 0.0, %v1941
        %v1943 = vpop.f32.mrb[0].mxu0
        %1944 = vmatprep.mubr.bf16.mxu0 0
        %1945 = vmatmul.mubr.bf16.gmra.mrb[0].mxu0 %v710
        %v1946 = vpop.f32.mrb[0].mxu0
        %v1947 = vadd.f32 0.0, %v1946
        %v1948 = vpop.f32.mrb[0].mxu0
        %v1949 = vpop.f32.mrb[0].mxu0
        %v1950 = vadd.f32 0.0, %v1949
        %v1951 = vpop.f32.mrb[0].mxu0
        %1952 = vmatprep.mubr.bf16.mxu0 0
        %1953 = vmatmul.mubr.bf16.gmra.mrb[0].mxu0 %v713
        %v1954 = vpop.f32.mrb[0].mxu0
        %v1955 = vadd.f32 0.0, %v1954
        %v1956 = vpop.f32.mrb[0].mxu0
        %v1957 = vpop.f32.mrb[0].mxu0
        %v1958 = vadd.f32 0.0, %v1957
        %v1959 = vpop.f32.mrb[0].mxu0
        %1960 = vmatprep.mubr.bf16.mxu0 0
        %1961 = vmatmul.mubr.bf16.gmra.mrb[0].mxu0 %v716
        %v1962 = vpop.f32.mrb[0].mxu0
        %v1963 = vadd.f32 0.0, %v1962
        %v1964 = vpop.f32.mrb[0].mxu0
        %v1965 = vpop.f32.mrb[0].mxu0
        %v1966 = vadd.f32 0.0, %v1965
        %v1967 = vpop.f32.mrb[0].mxu0
        %1968 = vmatprep.mubr.bf16.mxu0 0
        %1969 = vmatmul.mubr.bf16.gmra.mrb[0].mxu0 %v719
        %v1970 = vpop.f32.mrb[0].mxu0
        %v1971 = vadd.f32 0.0, %v1970
        %v1972 = vpop.f32.mrb[0].mxu0
        %v1973 = vpop.f32.mrb[0].mxu0
        %v1974 = vadd.f32 0.0, %v1973
        %v1975 = vpop.f32.mrb[0].mxu0
        %1976 = vmatprep.mubr.bf16.mxu0 0
        %1977 = vmatmul.mubr.bf16.gmra.mrb[0].mxu0 %v722
        %v1978 = vpop.f32.mrb[0].mxu0
        %v1979 = vadd.f32 0.0, %v1978
        %v1980 = vpop.f32.mrb[0].mxu0
        %v1981 = vpop.f32.mrb[0].mxu0
        %v1982 = vadd.f32 0.0, %v1981
        %v1983 = vpop.f32.mrb[0].mxu0
        %1984 = vmatprep.mubr.bf16.mxu0 0
        %1985 = vmatmul.mubr.bf16.gmra.mrb[0].mxu0 %v725
        %v1986 = vpop.f32.mrb[0].mxu0
        %v1987 = vadd.f32 0.0, %v1986
        %v1988 = vpop.f32.mrb[0].mxu0
        %v1989 = vpop.f32.mrb[0].mxu0
        %v1990 = vadd.f32 0.0, %v1989
        %v1991 = vpop.f32.mrb[0].mxu0
        %1992 = vmatprep.mubr.bf16.mxu0 0
        %1993 = vmatmul.mubr.bf16.gmra.mrb[0].mxu0 %v728
        %v1994 = vpop.f32.mrb[0].mxu0
        %v1995 = vadd.f32 0.0, %v1994
        %v1996 = vpop.f32.mrb[0].mxu0
        %v1997 = vpop.f32.mrb[0].mxu0
        %v1998 = vadd.f32 0.0, %v1997
        %v1999 = vpop.f32.mrb[0].mxu0
        %2000 = vmatprep.mubr.bf16.mxu0 0
        %2001 = vmatmul.mubr.bf16.gmra.mrb[0].mxu0 %v731
        %v2002 = vpop.f32.mrb[0].mxu0
        %v2003 = vadd.f32 0.0, %v2002
        %v2004 = vpop.f32.mrb[0].mxu0
        %v2005 = vpop.f32.mrb[0].mxu0
        %v2006 = vadd.f32 0.0, %v2005
        %v2007 = vpop.f32.mrb[0].mxu0
        %2008 = vmatprep.mubr.bf16.mxu0 0
        %2009 = vmatmul.mubr.bf16.gmra.mrb[0].mxu0 %v1851
        %v2010 = vpop.f32.mrb[0].mxu0
        %v2011 = vadd.f32 0.0, %v2010
        %v2012 = vpop.f32.mrb[0].mxu0
        %v2013 = vpop.f32.mrb[0].mxu0
        %v2014 = vadd.f32 0.0, %v2013
        %v2015 = vpop.f32.mrb[0].mxu0
        %2016 = vdwg.mxu0
        %v2017 = vadd.f32 %v1789, %v1891
        %v2018 = vadd.f32 %v1790, %v1894
        %v2019 = vadd.f32 %v1791, %v1899
        %v2020 = vadd.f32 %v1792, %v1902
        %v2021 = vadd.f32 %v1793, %v1907
        %v2022 = vadd.f32 %v1794, %v1910
        %v2023 = vadd.f32 %v1795, %v1915
        %v2024 = vadd.f32 %v1796, %v1918
        %v2025 = vadd.f32 %v1797, %v1923
        %v2026 = vadd.f32 %v1798, %v1926
        %v2027 = vadd.f32 %v1799, %v1931
        %v2028 = vadd.f32 %v1800, %v1934
        %v2029 = vadd.f32 %v1801, %v1939
        %v2030 = vadd.f32 %v1802, %v1942
        %v2031 = vadd.f32 %v1803, %v1947
        %v2032 = vadd.f32 %v1804, %v1950
        %v2033 = vadd.f32 %v1805, %v1955
        %v2034 = vadd.f32 %v1806, %v1958
        %v2035 = vadd.f32 %v1807, %v1963
        %v2036 = vadd.f32 %v1808, %v1966
        %v2037 = vadd.f32 %v1809, %v1971
        %v2038 = vadd.f32 %v1810, %v1974
        %v2039 = vadd.f32 %v1811, %v1979
        %v2040 = vadd.f32 %v1812, %v1982
        %v2041 = vadd.f32 %v1813, %v1987
        %v2042 = vadd.f32 %v1814, %v1990
        %v2043 = vadd.f32 %v1815, %v1995
        %v2044 = vadd.f32 %v1816, %v1998
        %v2045 = vadd.f32 %v1817, %v2003
        %v2046 = vadd.f32 %v1818, %v2006
        %v2047 = vadd.f32 %v1819, %v2011
        %v2048 = vadd.f32 %v1820, %v2014
        %v2050 = vrot.slane %v240, 5
        %v2051 = vrot.slane %v2050, 4
        %v2052 = vrot.slane %v241, 5
        %v2053 = vsel %vm1208, %v2051, %v2052
        %v2054 = vrot.slane %v2052, 4
        %v2055 = vrot.slane %v242, 5
        %v2056 = vsel %vm1208, %v2054, %v2055
        %s2057 = scalar_lea.vmem %s1, 10
        %v2058 = vld [vmem:[%s2057] sm:$0x3]
        %v2059 = vunpack.c.l.b16 %v2053
        %v2060 = vunpack.c.l.b16 %v2056
        %v2061 = vpack.c.b16 %v2060, %v2059
        %v2063 = vsel %vm684, %v2061, 0
        %v2066 = vsel %vm733, %v2058, 0
        %2068 = vmatprep.subr.bf16.mxu0 0
        %2069 = vmatpush1.bf16.msra.mxu0 %v2066
        %2070 = vmatprep.subr.bf16.mxu0 0
        %2071 = vmatpush1.bf16.msra.mxu0 0
        %2072 = vmatprep.subr.bf16.mxu0 0
        %2073 = vmatpush1.bf16.msra.mxu0 0
        %2074 = vmatprep.subr.bf16.mxu0 0
        %2075 = vmatpush1.bf16.msra.mxu0 0
        %2076 = vmatprep.subr.bf16.mxu0 0
        %2077 = vmatpush1.bf16.msra.mxu0 0
        %2078 = vmatprep.subr.bf16.mxu0 0
        %2079 = vmatpush1.bf16.msra.mxu0 0
        %2080 = vmatprep.subr.bf16.mxu0 0
        %2081 = vmatpush1.bf16.msra.mxu0 0
        %2082 = vmatprep.subr.bf16.mxu0 0
        %2083 = vmatpush1.bf16.msra.mxu0 0
        %2084 = vmatprep.subr.bf16.mxu0 0
        %2085 = vmatpush1.bf16.msra.mxu0 0
        %2086 = vmatprep.subr.bf16.mxu0 0
        %2087 = vmatpush1.bf16.msra.mxu0 0
        %2088 = vmatprep.subr.bf16.mxu0 0
        %2089 = vmatpush1.bf16.msra.mxu0 0
        %2090 = vmatprep.subr.bf16.mxu0 0
        %2091 = vmatpush1.bf16.msra.mxu0 0
        %2092 = vmatprep.subr.bf16.mxu0 0
        %2093 = vmatpush1.bf16.msra.mxu0 0
        %2094 = vmatprep.subr.bf16.mxu0 0
        %2095 = vmatpush1.bf16.msra.mxu0 0
        %2096 = vmatprep.subr.bf16.mxu0 0
        %2097 = vmatpush1.bf16.msra.mxu0 0
        %2098 = vmatprep.subr.bf16.mxu0 0
        %2099 = vmatpush1.bf16.msra.mxu0 0
        %2100 = vmatprep.mubr.bf16.mxu0 0
        %2101 = vmatmul.mubr.bf16.gmra.mrb[0].mxu0 %v1375
        %v2102 = vpop.f32.mrb[0].mxu0
        %v2103 = vadd.f32 0.0, %v2102
        %v2104 = vpop.f32.mrb[0].mxu0
        %v2105 = vpop.f32.mrb[0].mxu0
        %v2106 = vadd.f32 0.0, %v2105
        %v2107 = vpop.f32.mrb[0].mxu0
        %2108 = vmatprep.mubr.bf16.mxu0 0
        %2109 = vmatmul.mubr.bf16.gmra.mrb[0].mxu0 %v1378
        %v2110 = vpop.f32.mrb[0].mxu0
        %v2111 = vadd.f32 0.0, %v2110
        %v2112 = vpop.f32.mrb[0].mxu0
        %v2113 = vpop.f32.mrb[0].mxu0
        %v2114 = vadd.f32 0.0, %v2113
        %v2115 = vpop.f32.mrb[0].mxu0
        %2116 = vmatprep.mubr.bf16.mxu0 0
        %2117 = vmatmul.mubr.bf16.gmra.mrb[0].mxu0 %v1381
        %v2118 = vpop.f32.mrb[0].mxu0
        %v2119 = vadd.f32 0.0, %v2118
        %v2120 = vpop.f32.mrb[0].mxu0
        %v2121 = vpop.f32.mrb[0].mxu0
        %v2122 = vadd.f32 0.0, %v2121
        %v2123 = vpop.f32.mrb[0].mxu0
        %2124 = vmatprep.mubr.bf16.mxu0 0
        %2125 = vmatmul.mubr.bf16.gmra.mrb[0].mxu0 %v1384
        %v2126 = vpop.f32.mrb[0].mxu0
        %v2127 = vadd.f32 0.0, %v2126
        %v2128 = vpop.f32.mrb[0].mxu0
        %v2129 = vpop.f32.mrb[0].mxu0
        %v2130 = vadd.f32 0.0, %v2129
        %v2131 = vpop.f32.mrb[0].mxu0
        %2132 = vmatprep.mubr.bf16.mxu0 0
        %2133 = vmatmul.mubr.bf16.gmra.mrb[0].mxu0 %v1387
        %v2134 = vpop.f32.mrb[0].mxu0
        %v2135 = vadd.f32 0.0, %v2134
        %v2136 = vpop.f32.mrb[0].mxu0
        %v2137 = vpop.f32.mrb[0].mxu0
        %v2138 = vadd.f32 0.0, %v2137
        %v2139 = vpop.f32.mrb[0].mxu0
        %2140 = vmatprep.mubr.bf16.mxu0 0
        %2141 = vmatmul.mubr.bf16.gmra.mrb[0].mxu0 %v1390
        %v2142 = vpop.f32.mrb[0].mxu0
        %v2143 = vadd.f32 0.0, %v2142
        %v2144 = vpop.f32.mrb[0].mxu0
        %v2145 = vpop.f32.mrb[0].mxu0
        %v2146 = vadd.f32 0.0, %v2145
        %v2147 = vpop.f32.mrb[0].mxu0
        %2148 = vmatprep.mubr.bf16.mxu0 0
        %2149 = vmatmul.mubr.bf16.gmra.mrb[0].mxu0 %v1393
        %v2150 = vpop.f32.mrb[0].mxu0
        %v2151 = vadd.f32 0.0, %v2150
        %v2152 = vpop.f32.mrb[0].mxu0
        %v2153 = vpop.f32.mrb[0].mxu0
        %v2154 = vadd.f32 0.0, %v2153
        %v2155 = vpop.f32.mrb[0].mxu0
        %2156 = vmatprep.mubr.bf16.mxu0 0
        %2157 = vmatmul.mubr.bf16.gmra.mrb[0].mxu0 %v1396
        %v2158 = vpop.f32.mrb[0].mxu0
        %v2159 = vadd.f32 0.0, %v2158
        %v2160 = vpop.f32.mrb[0].mxu0
        %v2161 = vpop.f32.mrb[0].mxu0
        %v2162 = vadd.f32 0.0, %v2161
        %v2163 = vpop.f32.mrb[0].mxu0
        %2164 = vmatprep.mubr.bf16.mxu0 0
        %2165 = vmatmul.mubr.bf16.gmra.mrb[0].mxu0 %v1399
        %v2166 = vpop.f32.mrb[0].mxu0
        %v2167 = vadd.f32 0.0, %v2166
        %v2168 = vpop.f32.mrb[0].mxu0
        %v2169 = vpop.f32.mrb[0].mxu0
        %v2170 = vadd.f32 0.0, %v2169
        %v2171 = vpop.f32.mrb[0].mxu0
        %2172 = vmatprep.mubr.bf16.mxu0 0
        %2173 = vmatmul.mubr.bf16.gmra.mrb[0].mxu0 %v1402
        %v2174 = vpop.f32.mrb[0].mxu0
        %v2175 = vadd.f32 0.0, %v2174
        %v2176 = vpop.f32.mrb[0].mxu0
        %v2177 = vpop.f32.mrb[0].mxu0
        %v2178 = vadd.f32 0.0, %v2177
        %v2179 = vpop.f32.mrb[0].mxu0
        %2180 = vmatprep.mubr.bf16.mxu0 0
        %2181 = vmatmul.mubr.bf16.gmra.mrb[0].mxu0 %v1405
        %v2182 = vpop.f32.mrb[0].mxu0
        %v2183 = vadd.f32 0.0, %v2182
        %v2184 = vpop.f32.mrb[0].mxu0
        %v2185 = vpop.f32.mrb[0].mxu0
        %v2186 = vadd.f32 0.0, %v2185
        %v2187 = vpop.f32.mrb[0].mxu0
        %2188 = vmatprep.mubr.bf16.mxu0 0
        %2189 = vmatmul.mubr.bf16.gmra.mrb[0].mxu0 %v1408
        %v2190 = vpop.f32.mrb[0].mxu0
        %v2191 = vadd.f32 0.0, %v2190
        %v2192 = vpop.f32.mrb[0].mxu0
        %v2193 = vpop.f32.mrb[0].mxu0
        %v2194 = vadd.f32 0.0, %v2193
        %v2195 = vpop.f32.mrb[0].mxu0
        %2196 = vmatprep.mubr.bf16.mxu0 0
        %2197 = vmatmul.mubr.bf16.gmra.mrb[0].mxu0 %v1411
        %v2198 = vpop.f32.mrb[0].mxu0
        %v2199 = vadd.f32 0.0, %v2198
        %v2200 = vpop.f32.mrb[0].mxu0
        %v2201 = vpop.f32.mrb[0].mxu0
        %v2202 = vadd.f32 0.0, %v2201
        %v2203 = vpop.f32.mrb[0].mxu0
        %2204 = vmatprep.mubr.bf16.mxu0 0
        %2205 = vmatmul.mubr.bf16.gmra.mrb[0].mxu0 %v1414
        %v2206 = vpop.f32.mrb[0].mxu0
        %v2207 = vadd.f32 0.0, %v2206
        %v2208 = vpop.f32.mrb[0].mxu0
        %v2209 = vpop.f32.mrb[0].mxu0
        %v2210 = vadd.f32 0.0, %v2209
        %v2211 = vpop.f32.mrb[0].mxu0
        %2212 = vmatprep.mubr.bf16.mxu0 0
        %2213 = vmatmul.mubr.bf16.gmra.mrb[0].mxu0 %v1417
        %v2214 = vpop.f32.mrb[0].mxu0
        %v2215 = vadd.f32 0.0, %v2214
        %v2216 = vpop.f32.mrb[0].mxu0
        %v2217 = vpop.f32.mrb[0].mxu0
        %v2218 = vadd.f32 0.0, %v2217
        %v2219 = vpop.f32.mrb[0].mxu0
        %2220 = vmatprep.mubr.bf16.mxu0 0
        %2221 = vmatmul.mubr.bf16.gmra.mrb[0].mxu0 %v2063
        %v2222 = vpop.f32.mrb[0].mxu0
        %v2223 = vadd.f32 0.0, %v2222
        %v2224 = vpop.f32.mrb[0].mxu0
        %v2225 = vpop.f32.mrb[0].mxu0
        %v2226 = vadd.f32 0.0, %v2225
        %v2227 = vpop.f32.mrb[0].mxu0
        %2228 = vdwg.mxu0
        %v2229 = vadd.f32 %v2017, %v2103
        %v2230 = vadd.f32 %v2018, %v2106
        %v2231 = vadd.f32 %v2019, %v2111
        %v2232 = vadd.f32 %v2020, %v2114
        %v2233 = vadd.f32 %v2021, %v2119
        %v2234 = vadd.f32 %v2022, %v2122
        %v2235 = vadd.f32 %v2023, %v2127
        %v2236 = vadd.f32 %v2024, %v2130
        %v2237 = vadd.f32 %v2025, %v2135
        %v2238 = vadd.f32 %v2026, %v2138
        %v2239 = vadd.f32 %v2027, %v2143
        %v2240 = vadd.f32 %v2028, %v2146
        %v2241 = vadd.f32 %v2029, %v2151
        %v2242 = vadd.f32 %v2030, %v2154
        %v2243 = vadd.f32 %v2031, %v2159
        %v2244 = vadd.f32 %v2032, %v2162
        %v2245 = vadd.f32 %v2033, %v2167
        %v2246 = vadd.f32 %v2034, %v2170
        %v2247 = vadd.f32 %v2035, %v2175
        %v2248 = vadd.f32 %v2036, %v2178
        %v2249 = vadd.f32 %v2037, %v2183
        %v2250 = vadd.f32 %v2038, %v2186
        %v2251 = vadd.f32 %v2039, %v2191
        %v2252 = vadd.f32 %v2040, %v2194
        %v2253 = vadd.f32 %v2041, %v2199
        %v2254 = vadd.f32 %v2042, %v2202
        %v2255 = vadd.f32 %v2043, %v2207
        %v2256 = vadd.f32 %v2044, %v2210
        %v2257 = vadd.f32 %v2045, %v2215
        %v2258 = vadd.f32 %v2046, %v2218
        %v2259 = vadd.f32 %v2047, %v2223
        %v2260 = vadd.f32 %v2048, %v2226
        %s2261 = scalar_lea.vmem %s1, 12
        %v2262 = vld [vmem:[%s2261] sm:$0x3]
        %v2265 = vunpack.c.l.b16 %v243
        %v2266 = vunpack.c.l.b16 %v244
        %v2267 = vpack.c.b16 %v2266, %v2265
        %v2269 = vsel %vm684, %v2267, 0
        %v2272 = vsel %vm733, %v2262, 0
        %2274 = vmatprep.subr.bf16.mxu0 0
        %2275 = vmatpush1.bf16.msra.mxu0 %v2272
        %2276 = vmatprep.subr.bf16.mxu0 0
        %2277 = vmatpush1.bf16.msra.mxu0 0
        %2278 = vmatprep.subr.bf16.mxu0 0
        %2279 = vmatpush1.bf16.msra.mxu0 0
        %2280 = vmatprep.subr.bf16.mxu0 0
        %2281 = vmatpush1.bf16.msra.mxu0 0
        %2282 = vmatprep.subr.bf16.mxu0 0
        %2283 = vmatpush1.bf16.msra.mxu0 0
        %2284 = vmatprep.subr.bf16.mxu0 0
        %2285 = vmatpush1.bf16.msra.mxu0 0
        %2286 = vmatprep.subr.bf16.mxu0 0
        %2287 = vmatpush1.bf16.msra.mxu0 0
        %2288 = vmatprep.subr.bf16.mxu0 0
        %2289 = vmatpush1.bf16.msra.mxu0 0
        %2290 = vmatprep.subr.bf16.mxu0 0
        %2291 = vmatpush1.bf16.msra.mxu0 0
        %2292 = vmatprep.subr.bf16.mxu0 0
        %2293 = vmatpush1.bf16.msra.mxu0 0
        %2294 = vmatprep.subr.bf16.mxu0 0
        %2295 = vmatpush1.bf16.msra.mxu0 0
        %2296 = vmatprep.subr.bf16.mxu0 0
        %2297 = vmatpush1.bf16.msra.mxu0 0
        %2298 = vmatprep.subr.bf16.mxu0 0
        %2299 = vmatpush1.bf16.msra.mxu0 0
        %2300 = vmatprep.subr.bf16.mxu0 0
        %2301 = vmatpush1.bf16.msra.mxu0 0
        %2302 = vmatprep.subr.bf16.mxu0 0
        %2303 = vmatpush1.bf16.msra.mxu0 0
        %2304 = vmatprep.subr.bf16.mxu0 0
        %2305 = vmatpush1.bf16.msra.mxu0 0
        %2306 = vmatprep.mubr.bf16.mxu0 0
        %2307 = vmatmul.mubr.bf16.gmra.mrb[0].mxu0 %v985
        %v2308 = vpop.f32.mrb[0].mxu0
        %v2309 = vadd.f32 0.0, %v2308
        %v2310 = vpop.f32.mrb[0].mxu0
        %v2311 = vpop.f32.mrb[0].mxu0
        %v2312 = vadd.f32 0.0, %v2311
        %v2313 = vpop.f32.mrb[0].mxu0
        %2314 = vmatprep.mubr.bf16.mxu0 0
        %2315 = vmatmul.mubr.bf16.gmra.mrb[0].mxu0 %v988
        %v2316 = vpop.f32.mrb[0].mxu0
        %v2317 = vadd.f32 0.0, %v2316
        %v2318 = vpop.f32.mrb[0].mxu0
        %v2319 = vpop.f32.mrb[0].mxu0
        %v2320 = vadd.f32 0.0, %v2319
        %v2321 = vpop.f32.mrb[0].mxu0
        %2322 = vmatprep.mubr.bf16.mxu0 0
        %2323 = vmatmul.mubr.bf16.gmra.mrb[0].mxu0 %v991
        %v2324 = vpop.f32.mrb[0].mxu0
        %v2325 = vadd.f32 0.0, %v2324
        %v2326 = vpop.f32.mrb[0].mxu0
        %v2327 = vpop.f32.mrb[0].mxu0
        %v2328 = vadd.f32 0.0, %v2327
        %v2329 = vpop.f32.mrb[0].mxu0
        %2330 = vmatprep.mubr.bf16.mxu0 0
        %2331 = vmatmul.mubr.bf16.gmra.mrb[0].mxu0 %v994
        %v2332 = vpop.f32.mrb[0].mxu0
        %v2333 = vadd.f32 0.0, %v2332
        %v2334 = vpop.f32.mrb[0].mxu0
        %v2335 = vpop.f32.mrb[0].mxu0
        %v2336 = vadd.f32 0.0, %v2335
        %v2337 = vpop.f32.mrb[0].mxu0
        %2338 = vmatprep.mubr.bf16.mxu0 0
        %2339 = vmatmul.mubr.bf16.gmra.mrb[0].mxu0 %v997
        %v2340 = vpop.f32.mrb[0].mxu0
        %v2341 = vadd.f32 0.0, %v2340
        %v2342 = vpop.f32.mrb[0].mxu0
        %v2343 = vpop.f32.mrb[0].mxu0
        %v2344 = vadd.f32 0.0, %v2343
        %v2345 = vpop.f32.mrb[0].mxu0
        %2346 = vmatprep.mubr.bf16.mxu0 0
        %2347 = vmatmul.mubr.bf16.gmra.mrb[0].mxu0 %v1000
        %v2348 = vpop.f32.mrb[0].mxu0
        %v2349 = vadd.f32 0.0, %v2348
        %v2350 = vpop.f32.mrb[0].mxu0
        %v2351 = vpop.f32.mrb[0].mxu0
        %v2352 = vadd.f32 0.0, %v2351
        %v2353 = vpop.f32.mrb[0].mxu0
        %2354 = vmatprep.mubr.bf16.mxu0 0
        %2355 = vmatmul.mubr.bf16.gmra.mrb[0].mxu0 %v1003
        %v2356 = vpop.f32.mrb[0].mxu0
        %v2357 = vadd.f32 0.0, %v2356
        %v2358 = vpop.f32.mrb[0].mxu0
        %v2359 = vpop.f32.mrb[0].mxu0
        %v2360 = vadd.f32 0.0, %v2359
        %v2361 = vpop.f32.mrb[0].mxu0
        %2362 = vmatprep.mubr.bf16.mxu0 0
        %2363 = vmatmul.mubr.bf16.gmra.mrb[0].mxu0 %v1006
        %v2364 = vpop.f32.mrb[0].mxu0
        %v2365 = vadd.f32 0.0, %v2364
        %v2366 = vpop.f32.mrb[0].mxu0
        %v2367 = vpop.f32.mrb[0].mxu0
        %v2368 = vadd.f32 0.0, %v2367
        %v2369 = vpop.f32.mrb[0].mxu0
        %2370 = vmatprep.mubr.bf16.mxu0 0
        %2371 = vmatmul.mubr.bf16.gmra.mrb[0].mxu0 %v1009
        %v2372 = vpop.f32.mrb[0].mxu0
        %v2373 = vadd.f32 0.0, %v2372
        %v2374 = vpop.f32.mrb[0].mxu0
        %v2375 = vpop.f32.mrb[0].mxu0
        %v2376 = vadd.f32 0.0, %v2375
        %v2377 = vpop.f32.mrb[0].mxu0
        %2378 = vmatprep.mubr.bf16.mxu0 0
        %2379 = vmatmul.mubr.bf16.gmra.mrb[0].mxu0 %v1012
        %v2380 = vpop.f32.mrb[0].mxu0
        %v2381 = vadd.f32 0.0, %v2380
        %v2382 = vpop.f32.mrb[0].mxu0
        %v2383 = vpop.f32.mrb[0].mxu0
        %v2384 = vadd.f32 0.0, %v2383
        %v2385 = vpop.f32.mrb[0].mxu0
        %2386 = vmatprep.mubr.bf16.mxu0 0
        %2387 = vmatmul.mubr.bf16.gmra.mrb[0].mxu0 %v1015
        %v2388 = vpop.f32.mrb[0].mxu0
        %v2389 = vadd.f32 0.0, %v2388
        %v2390 = vpop.f32.mrb[0].mxu0
        %v2391 = vpop.f32.mrb[0].mxu0
        %v2392 = vadd.f32 0.0, %v2391
        %v2393 = vpop.f32.mrb[0].mxu0
        %2394 = vmatprep.mubr.bf16.mxu0 0
        %2395 = vmatmul.mubr.bf16.gmra.mrb[0].mxu0 %v1018
        %v2396 = vpop.f32.mrb[0].mxu0
        %v2397 = vadd.f32 0.0, %v2396
        %v2398 = vpop.f32.mrb[0].mxu0
        %v2399 = vpop.f32.mrb[0].mxu0
        %v2400 = vadd.f32 0.0, %v2399
        %v2401 = vpop.f32.mrb[0].mxu0
        %2402 = vmatprep.mubr.bf16.mxu0 0
        %2403 = vmatmul.mubr.bf16.gmra.mrb[0].mxu0 %v1021
        %v2404 = vpop.f32.mrb[0].mxu0
        %v2405 = vadd.f32 0.0, %v2404
        %v2406 = vpop.f32.mrb[0].mxu0
        %v2407 = vpop.f32.mrb[0].mxu0
        %v2408 = vadd.f32 0.0, %v2407
        %v2409 = vpop.f32.mrb[0].mxu0
        %2410 = vmatprep.mubr.bf16.mxu0 0
        %2411 = vmatmul.mubr.bf16.gmra.mrb[0].mxu0 %v1024
        %v2412 = vpop.f32.mrb[0].mxu0
        %v2413 = vadd.f32 0.0, %v2412
        %v2414 = vpop.f32.mrb[0].mxu0
        %v2415 = vpop.f32.mrb[0].mxu0
        %v2416 = vadd.f32 0.0, %v2415
        %v2417 = vpop.f32.mrb[0].mxu0
        %2418 = vmatprep.mubr.bf16.mxu0 0
        %2419 = vmatmul.mubr.bf16.gmra.mrb[0].mxu0 %v1623
        %v2420 = vpop.f32.mrb[0].mxu0
        %v2421 = vadd.f32 0.0, %v2420
        %v2422 = vpop.f32.mrb[0].mxu0
        %v2423 = vpop.f32.mrb[0].mxu0
        %v2424 = vadd.f32 0.0, %v2423
        %v2425 = vpop.f32.mrb[0].mxu0
        %2426 = vmatprep.mubr.bf16.mxu0 0
        %2427 = vmatmul.mubr.bf16.gmra.mrb[0].mxu0 %v2269
        %v2428 = vpop.f32.mrb[0].mxu0
        %v2429 = vadd.f32 0.0, %v2428
        %v2430 = vpop.f32.mrb[0].mxu0
        %v2431 = vpop.f32.mrb[0].mxu0
        %v2432 = vadd.f32 0.0, %v2431
        %v2433 = vpop.f32.mrb[0].mxu0
        %2434 = vdwg.mxu0
        %v2435 = vadd.f32 %v2229, %v2309
        %v2436 = vadd.f32 %v2230, %v2312
        %v2437 = vadd.f32 %v2231, %v2317
        %v2438 = vadd.f32 %v2232, %v2320
        %v2439 = vadd.f32 %v2233, %v2325
        %v2440 = vadd.f32 %v2234, %v2328
        %v2441 = vadd.f32 %v2235, %v2333
        %v2442 = vadd.f32 %v2236, %v2336
        %v2443 = vadd.f32 %v2237, %v2341
        %v2444 = vadd.f32 %v2238, %v2344
        %v2445 = vadd.f32 %v2239, %v2349
        %v2446 = vadd.f32 %v2240, %v2352
        %v2447 = vadd.f32 %v2241, %v2357
        %v2448 = vadd.f32 %v2242, %v2360
        %v2449 = vadd.f32 %v2243, %v2365
        %v2450 = vadd.f32 %v2244, %v2368
        %v2451 = vadd.f32 %v2245, %v2373
        %v2452 = vadd.f32 %v2246, %v2376
        %v2453 = vadd.f32 %v2247, %v2381
        %v2454 = vadd.f32 %v2248, %v2384
        %v2455 = vadd.f32 %v2249, %v2389
        %v2456 = vadd.f32 %v2250, %v2392
        %v2457 = vadd.f32 %v2251, %v2397
        %v2458 = vadd.f32 %v2252, %v2400
        %v2459 = vadd.f32 %v2253, %v2405
        %v2460 = vadd.f32 %v2254, %v2408
        %v2461 = vadd.f32 %v2255, %v2413
        %v2462 = vadd.f32 %v2256, %v2416
        %v2463 = vadd.f32 %v2257, %v2421
        %v2464 = vadd.f32 %v2258, %v2424
        %v2465 = vadd.f32 %v2259, %v2429
        %v2466 = vadd.f32 %v2260, %v2432
        %v2468 = vshrl.u32 %v243, 16
        %v2470 = vrot.slane %v2468, 4
        %v2471 = vshll.u32 %v243, 16
        %v2473 = vrot.slane %v2471, 5
        %v2474 = vor.u32 %v2470, %v2473
        %v2475 = vrot.slane %v2474, 4
        %v2477 = vshll.u32 %v244, 16
        %v2479 = vrot.slane %v2477, 5
        %v2480 = vsel %vm249, %v2475, %v2479
        %v2481 = vshrl.u32 %v244, 16
        %v2483 = vrot.slane %v2481, 4
        %v2484 = vor.u32 %v2483, %v2479
        %v2485 = vrot.slane %v2484, 4
        %v2487 = vshll.u32 %v245, 16
        %v2489 = vrot.slane %v2487, 5
        %v2490 = vsel %vm249, %v2485, %v2489
        %s2491 = scalar_lea.vmem %s1, 14
        %v2492 = vld [vmem:[%s2491] sm:$0x3]
        %v2493 = vunpack.c.l.b16 %v2480
        %v2494 = vunpack.c.l.b16 %v2490
        %v2495 = vpack.c.b16 %v2494, %v2493
        %v2497 = vsel %vm684, %v2495, 0
        %v2500 = vsel %vm733, %v2492, 0
        %2502 = vmatprep.subr.bf16.mxu0 0
        %2503 = vmatpush1.bf16.msra.mxu0 %v2500
        %2504 = vmatprep.subr.bf16.mxu0 0
        %2505 = vmatpush1.bf16.msra.mxu0 0
        %2506 = vmatprep.subr.bf16.mxu0 0
        %2507 = vmatpush1.bf16.msra.mxu0 0
        %2508 = vmatprep.subr.bf16.mxu0 0
        %2509 = vmatpush1.bf16.msra.mxu0 0
        %2510 = vmatprep.subr.bf16.mxu0 0
        %2511 = vmatpush1.bf16.msra.mxu0 0
        %2512 = vmatprep.subr.bf16.mxu0 0
        %2513 = vmatpush1.bf16.msra.mxu0 0
        %2514 = vmatprep.subr.bf16.mxu0 0
        %2515 = vmatpush1.bf16.msra.mxu0 0
        %2516 = vmatprep.subr.bf16.mxu0 0
        %2517 = vmatpush1.bf16.msra.mxu0 0
        %2518 = vmatprep.subr.bf16.mxu0 0
        %2519 = vmatpush1.bf16.msra.mxu0 0
        %2520 = vmatprep.subr.bf16.mxu0 0
        %2521 = vmatpush1.bf16.msra.mxu0 0
        %2522 = vmatprep.subr.bf16.mxu0 0
        %2523 = vmatpush1.bf16.msra.mxu0 0
        %2524 = vmatprep.subr.bf16.mxu0 0
        %2525 = vmatpush1.bf16.msra.mxu0 0
        %2526 = vmatprep.subr.bf16.mxu0 0
        %2527 = vmatpush1.bf16.msra.mxu0 0
        %2528 = vmatprep.subr.bf16.mxu0 0
        %2529 = vmatpush1.bf16.msra.mxu0 0
        %2530 = vmatprep.subr.bf16.mxu0 0
        %2531 = vmatpush1.bf16.msra.mxu0 0
        %2532 = vmatprep.subr.bf16.mxu0 0
        %2533 = vmatpush1.bf16.msra.mxu0 0
        %2534 = vmatprep.mubr.bf16.mxu0 0
        %2535 = vmatmul.mubr.bf16.gmra.mrb[0].mxu0 %v692
        %v2536 = vpop.f32.mrb[0].mxu0
        %v2537 = vadd.f32 0.0, %v2536
        %v2538 = vpop.f32.mrb[0].mxu0
        %v2539 = vpop.f32.mrb[0].mxu0
        %v2540 = vadd.f32 0.0, %v2539
        %v2541 = vpop.f32.mrb[0].mxu0
        %2542 = vmatprep.mubr.bf16.mxu0 0
        %2543 = vmatmul.mubr.bf16.gmra.mrb[0].mxu0 %v695
        %v2544 = vpop.f32.mrb[0].mxu0
        %v2545 = vadd.f32 0.0, %v2544
        %v2546 = vpop.f32.mrb[0].mxu0
        %v2547 = vpop.f32.mrb[0].mxu0
        %v2548 = vadd.f32 0.0, %v2547
        %v2549 = vpop.f32.mrb[0].mxu0
        %2550 = vmatprep.mubr.bf16.mxu0 0
        %2551 = vmatmul.mubr.bf16.gmra.mrb[0].mxu0 %v698
        %v2552 = vpop.f32.mrb[0].mxu0
        %v2553 = vadd.f32 0.0, %v2552
        %v2554 = vpop.f32.mrb[0].mxu0
        %v2555 = vpop.f32.mrb[0].mxu0
        %v2556 = vadd.f32 0.0, %v2555
        %v2557 = vpop.f32.mrb[0].mxu0
        %2558 = vmatprep.mubr.bf16.mxu0 0
        %2559 = vmatmul.mubr.bf16.gmra.mrb[0].mxu0 %v701
        %v2560 = vpop.f32.mrb[0].mxu0
        %v2561 = vadd.f32 0.0, %v2560
        %v2562 = vpop.f32.mrb[0].mxu0
        %v2563 = vpop.f32.mrb[0].mxu0
        %v2564 = vadd.f32 0.0, %v2563
        %v2565 = vpop.f32.mrb[0].mxu0
        %2566 = vmatprep.mubr.bf16.mxu0 0
        %2567 = vmatmul.mubr.bf16.gmra.mrb[0].mxu0 %v704
        %v2568 = vpop.f32.mrb[0].mxu0
        %v2569 = vadd.f32 0.0, %v2568
        %v2570 = vpop.f32.mrb[0].mxu0
        %v2571 = vpop.f32.mrb[0].mxu0
        %v2572 = vadd.f32 0.0, %v2571
        %v2573 = vpop.f32.mrb[0].mxu0
        %2574 = vmatprep.mubr.bf16.mxu0 0
        %2575 = vmatmul.mubr.bf16.gmra.mrb[0].mxu0 %v707
        %v2576 = vpop.f32.mrb[0].mxu0
        %v2577 = vadd.f32 0.0, %v2576
        %v2578 = vpop.f32.mrb[0].mxu0
        %v2579 = vpop.f32.mrb[0].mxu0
        %v2580 = vadd.f32 0.0, %v2579
        %v2581 = vpop.f32.mrb[0].mxu0
        %2582 = vmatprep.mubr.bf16.mxu0 0
        %2583 = vmatmul.mubr.bf16.gmra.mrb[0].mxu0 %v710
        %v2584 = vpop.f32.mrb[0].mxu0
        %v2585 = vadd.f32 0.0, %v2584
        %v2586 = vpop.f32.mrb[0].mxu0
        %v2587 = vpop.f32.mrb[0].mxu0
        %v2588 = vadd.f32 0.0, %v2587
        %v2589 = vpop.f32.mrb[0].mxu0
        %2590 = vmatprep.mubr.bf16.mxu0 0
        %2591 = vmatmul.mubr.bf16.gmra.mrb[0].mxu0 %v713
        %v2592 = vpop.f32.mrb[0].mxu0
        %v2593 = vadd.f32 0.0, %v2592
        %v2594 = vpop.f32.mrb[0].mxu0
        %v2595 = vpop.f32.mrb[0].mxu0
        %v2596 = vadd.f32 0.0, %v2595
        %v2597 = vpop.f32.mrb[0].mxu0
        %2598 = vmatprep.mubr.bf16.mxu0 0
        %2599 = vmatmul.mubr.bf16.gmra.mrb[0].mxu0 %v716
        %v2600 = vpop.f32.mrb[0].mxu0
        %v2601 = vadd.f32 0.0, %v2600
        %v2602 = vpop.f32.mrb[0].mxu0
        %v2603 = vpop.f32.mrb[0].mxu0
        %v2604 = vadd.f32 0.0, %v2603
        %v2605 = vpop.f32.mrb[0].mxu0
        %2606 = vmatprep.mubr.bf16.mxu0 0
        %2607 = vmatmul.mubr.bf16.gmra.mrb[0].mxu0 %v719
        %v2608 = vpop.f32.mrb[0].mxu0
        %v2609 = vadd.f32 0.0, %v2608
        %v2610 = vpop.f32.mrb[0].mxu0
        %v2611 = vpop.f32.mrb[0].mxu0
        %v2612 = vadd.f32 0.0, %v2611
        %v2613 = vpop.f32.mrb[0].mxu0
        %2614 = vmatprep.mubr.bf16.mxu0 0
        %2615 = vmatmul.mubr.bf16.gmra.mrb[0].mxu0 %v722
        %v2616 = vpop.f32.mrb[0].mxu0
        %v2617 = vadd.f32 0.0, %v2616
        %v2618 = vpop.f32.mrb[0].mxu0
        %v2619 = vpop.f32.mrb[0].mxu0
        %v2620 = vadd.f32 0.0, %v2619
        %v2621 = vpop.f32.mrb[0].mxu0
        %2622 = vmatprep.mubr.bf16.mxu0 0
        %2623 = vmatmul.mubr.bf16.gmra.mrb[0].mxu0 %v725
        %v2624 = vpop.f32.mrb[0].mxu0
        %v2625 = vadd.f32 0.0, %v2624
        %v2626 = vpop.f32.mrb[0].mxu0
        %v2627 = vpop.f32.mrb[0].mxu0
        %v2628 = vadd.f32 0.0, %v2627
        %v2629 = vpop.f32.mrb[0].mxu0
        %2630 = vmatprep.mubr.bf16.mxu0 0
        %2631 = vmatmul.mubr.bf16.gmra.mrb[0].mxu0 %v728
        %v2632 = vpop.f32.mrb[0].mxu0
        %v2633 = vadd.f32 0.0, %v2632
        %v2634 = vpop.f32.mrb[0].mxu0
        %v2635 = vpop.f32.mrb[0].mxu0
        %v2636 = vadd.f32 0.0, %v2635
        %v2637 = vpop.f32.mrb[0].mxu0
        %2638 = vmatprep.mubr.bf16.mxu0 0
        %2639 = vmatmul.mubr.bf16.gmra.mrb[0].mxu0 %v731
        %v2640 = vpop.f32.mrb[0].mxu0
        %v2641 = vadd.f32 0.0, %v2640
        %v2642 = vpop.f32.mrb[0].mxu0
        %v2643 = vpop.f32.mrb[0].mxu0
        %v2644 = vadd.f32 0.0, %v2643
        %v2645 = vpop.f32.mrb[0].mxu0
        %2646 = vmatprep.mubr.bf16.mxu0 0
        %2647 = vmatmul.mubr.bf16.gmra.mrb[0].mxu0 %v1851
        %v2648 = vpop.f32.mrb[0].mxu0
        %v2649 = vadd.f32 0.0, %v2648
        %v2650 = vpop.f32.mrb[0].mxu0
        %v2651 = vpop.f32.mrb[0].mxu0
        %v2652 = vadd.f32 0.0, %v2651
        %v2653 = vpop.f32.mrb[0].mxu0
        %2654 = vmatprep.mubr.bf16.mxu0 0
        %2655 = vmatmul.mubr.bf16.gmra.mrb[0].mxu0 %v2497
        %v2656 = vpop.f32.mrb[0].mxu0
        %v2657 = vadd.f32 0.0, %v2656
        %v2658 = vpop.f32.mrb[0].mxu0
        %v2659 = vpop.f32.mrb[0].mxu0
        %v2660 = vadd.f32 0.0, %v2659
        %v2661 = vpop.f32.mrb[0].mxu0
        %2662 = vdwg.mxu0
        %v2663 = vadd.f32 %v2435, %v2537
        %v2664 = vadd.f32 %v2436, %v2540
        %v2665 = vadd.f32 %v2437, %v2545
        %v2666 = vadd.f32 %v2438, %v2548
        %v2667 = vadd.f32 %v2439, %v2553
        %v2668 = vadd.f32 %v2440, %v2556
        %v2669 = vadd.f32 %v2441, %v2561
        %v2670 = vadd.f32 %v2442, %v2564
        %v2671 = vadd.f32 %v2443, %v2569
        %v2672 = vadd.f32 %v2444, %v2572
        %v2673 = vadd.f32 %v2445, %v2577
        %v2674 = vadd.f32 %v2446, %v2580
        %v2675 = vadd.f32 %v2447, %v2585
        %v2676 = vadd.f32 %v2448, %v2588
        %v2677 = vadd.f32 %v2449, %v2593
        %v2678 = vadd.f32 %v2450, %v2596
        %v2679 = vadd.f32 %v2451, %v2601
        %v2680 = vadd.f32 %v2452, %v2604
        %v2681 = vadd.f32 %v2453, %v2609
        %v2682 = vadd.f32 %v2454, %v2612
        %v2683 = vadd.f32 %v2455, %v2617
        %v2684 = vadd.f32 %v2456, %v2620
        %v2685 = vadd.f32 %v2457, %v2625
        %v2686 = vadd.f32 %v2458, %v2628
        %v2687 = vadd.f32 %v2459, %v2633
        %v2688 = vadd.f32 %v2460, %v2636
        %v2689 = vadd.f32 %v2461, %v2641
        %v2690 = vadd.f32 %v2462, %v2644
        %v2691 = vadd.f32 %v2463, %v2649
        %v2692 = vadd.f32 %v2464, %v2652
        %v2693 = vadd.f32 %v2465, %v2657
        %v2694 = vadd.f32 %v2466, %v2660
        %v2696 = vrot.slane %v243, 5
        %v2697 = vrot.slane %v2696, 4
        %v2698 = vrot.slane %v244, 5
        %v2699 = vsel %vm1208, %v2697, %v2698
        %v2700 = vrot.slane %v2698, 4
        %v2701 = vrot.slane %v245, 5
        %v2702 = vsel %vm1208, %v2700, %v2701
        %s2703 = scalar_lea.vmem %s1, 16
        %v2704 = vld [vmem:[%s2703] sm:$0x3]
        %v2705 = vunpack.c.l.b16 %v2699
        %v2706 = vunpack.c.l.b16 %v2702
        %v2707 = vpack.c.b16 %v2706, %v2705
        %v2709 = vsel %vm684, %v2707, 0
        %v2712 = vsel %vm733, %v2704, 0
        %2714 = vmatprep.subr.bf16.mxu0 0
        %2715 = vmatpush1.bf16.msra.mxu0 %v2712
        %2716 = vmatprep.subr.bf16.mxu0 0
        %2717 = vmatpush1.bf16.msra.mxu0 0
        %2718 = vmatprep.subr.bf16.mxu0 0
        %2719 = vmatpush1.bf16.msra.mxu0 0
        %2720 = vmatprep.subr.bf16.mxu0 0
        %2721 = vmatpush1.bf16.msra.mxu0 0
        %2722 = vmatprep.subr.bf16.mxu0 0
        %2723 = vmatpush1.bf16.msra.mxu0 0
        %2724 = vmatprep.subr.bf16.mxu0 0
        %2725 = vmatpush1.bf16.msra.mxu0 0
        %2726 = vmatprep.subr.bf16.mxu0 0
        %2727 = vmatpush1.bf16.msra.mxu0 0
        %2728 = vmatprep.subr.bf16.mxu0 0
        %2729 = vmatpush1.bf16.msra.mxu0 0
        %2730 = vmatprep.subr.bf16.mxu0 0
        %2731 = vmatpush1.bf16.msra.mxu0 0
        %2732 = vmatprep.subr.bf16.mxu0 0
        %2733 = vmatpush1.bf16.msra.mxu0 0
        %2734 = vmatprep.subr.bf16.mxu0 0
        %2735 = vmatpush1.bf16.msra.mxu0 0
        %2736 = vmatprep.subr.bf16.mxu0 0
        %2737 = vmatpush1.bf16.msra.mxu0 0
        %2738 = vmatprep.subr.bf16.mxu0 0
        %2739 = vmatpush1.bf16.msra.mxu0 0
        %2740 = vmatprep.subr.bf16.mxu0 0
        %2741 = vmatpush1.bf16.msra.mxu0 0
        %2742 = vmatprep.subr.bf16.mxu0 0
        %2743 = vmatpush1.bf16.msra.mxu0 0
        %2744 = vmatprep.subr.bf16.mxu0 0
        %2745 = vmatpush1.bf16.msra.mxu0 0
        %2746 = vmatprep.mubr.bf16.mxu0 0
        %2747 = vmatmul.mubr.bf16.gmra.mrb[0].mxu0 %v1378
        %v2748 = vpop.f32.mrb[0].mxu0
        %v2749 = vadd.f32 0.0, %v2748
        %v2750 = vpop.f32.mrb[0].mxu0
        %v2751 = vpop.f32.mrb[0].mxu0
        %v2752 = vadd.f32 0.0, %v2751
        %v2753 = vpop.f32.mrb[0].mxu0
        %2754 = vmatprep.mubr.bf16.mxu0 0
        %2755 = vmatmul.mubr.bf16.gmra.mrb[0].mxu0 %v1381
        %v2756 = vpop.f32.mrb[0].mxu0
        %v2757 = vadd.f32 0.0, %v2756
        %v2758 = vpop.f32.mrb[0].mxu0
        %v2759 = vpop.f32.mrb[0].mxu0
        %v2760 = vadd.f32 0.0, %v2759
        %v2761 = vpop.f32.mrb[0].mxu0
        %2762 = vmatprep.mubr.bf16.mxu0 0
        %2763 = vmatmul.mubr.bf16.gmra.mrb[0].mxu0 %v1384
        %v2764 = vpop.f32.mrb[0].mxu0
        %v2765 = vadd.f32 0.0, %v2764
        %v2766 = vpop.f32.mrb[0].mxu0
        %v2767 = vpop.f32.mrb[0].mxu0
        %v2768 = vadd.f32 0.0, %v2767
        %v2769 = vpop.f32.mrb[0].mxu0
        %2770 = vmatprep.mubr.bf16.mxu0 0
        %2771 = vmatmul.mubr.bf16.gmra.mrb[0].mxu0 %v1387
        %v2772 = vpop.f32.mrb[0].mxu0
        %v2773 = vadd.f32 0.0, %v2772
        %v2774 = vpop.f32.mrb[0].mxu0
        %v2775 = vpop.f32.mrb[0].mxu0
        %v2776 = vadd.f32 0.0, %v2775
        %v2777 = vpop.f32.mrb[0].mxu0
        %2778 = vmatprep.mubr.bf16.mxu0 0
        %2779 = vmatmul.mubr.bf16.gmra.mrb[0].mxu0 %v1390
        %v2780 = vpop.f32.mrb[0].mxu0
        %v2781 = vadd.f32 0.0, %v2780
        %v2782 = vpop.f32.mrb[0].mxu0
        %v2783 = vpop.f32.mrb[0].mxu0
        %v2784 = vadd.f32 0.0, %v2783
        %v2785 = vpop.f32.mrb[0].mxu0
        %2786 = vmatprep.mubr.bf16.mxu0 0
        %2787 = vmatmul.mubr.bf16.gmra.mrb[0].mxu0 %v1393
        %v2788 = vpop.f32.mrb[0].mxu0
        %v2789 = vadd.f32 0.0, %v2788
        %v2790 = vpop.f32.mrb[0].mxu0
        %v2791 = vpop.f32.mrb[0].mxu0
        %v2792 = vadd.f32 0.0, %v2791
        %v2793 = vpop.f32.mrb[0].mxu0
        %2794 = vmatprep.mubr.bf16.mxu0 0
        %2795 = vmatmul.mubr.bf16.gmra.mrb[0].mxu0 %v1396
        %v2796 = vpop.f32.mrb[0].mxu0
        %v2797 = vadd.f32 0.0, %v2796
        %v2798 = vpop.f32.mrb[0].mxu0
        %v2799 = vpop.f32.mrb[0].mxu0
        %v2800 = vadd.f32 0.0, %v2799
        %v2801 = vpop.f32.mrb[0].mxu0
        %2802 = vmatprep.mubr.bf16.mxu0 0
        %2803 = vmatmul.mubr.bf16.gmra.mrb[0].mxu0 %v1399
        %v2804 = vpop.f32.mrb[0].mxu0
        %v2805 = vadd.f32 0.0, %v2804
        %v2806 = vpop.f32.mrb[0].mxu0
        %v2807 = vpop.f32.mrb[0].mxu0
        %v2808 = vadd.f32 0.0, %v2807
        %v2809 = vpop.f32.mrb[0].mxu0
        %2810 = vmatprep.mubr.bf16.mxu0 0
        %2811 = vmatmul.mubr.bf16.gmra.mrb[0].mxu0 %v1402
        %v2812 = vpop.f32.mrb[0].mxu0
        %v2813 = vadd.f32 0.0, %v2812
        %v2814 = vpop.f32.mrb[0].mxu0
        %v2815 = vpop.f32.mrb[0].mxu0
        %v2816 = vadd.f32 0.0, %v2815
        %v2817 = vpop.f32.mrb[0].mxu0
        %2818 = vmatprep.mubr.bf16.mxu0 0
        %2819 = vmatmul.mubr.bf16.gmra.mrb[0].mxu0 %v1405
        %v2820 = vpop.f32.mrb[0].mxu0
        %v2821 = vadd.f32 0.0, %v2820
        %v2822 = vpop.f32.mrb[0].mxu0
        %v2823 = vpop.f32.mrb[0].mxu0
        %v2824 = vadd.f32 0.0, %v2823
        %v2825 = vpop.f32.mrb[0].mxu0
        %2826 = vmatprep.mubr.bf16.mxu0 0
        %2827 = vmatmul.mubr.bf16.gmra.mrb[0].mxu0 %v1408
        %v2828 = vpop.f32.mrb[0].mxu0
        %v2829 = vadd.f32 0.0, %v2828
        %v2830 = vpop.f32.mrb[0].mxu0
        %v2831 = vpop.f32.mrb[0].mxu0
        %v2832 = vadd.f32 0.0, %v2831
        %v2833 = vpop.f32.mrb[0].mxu0
        %2834 = vmatprep.mubr.bf16.mxu0 0
        %2835 = vmatmul.mubr.bf16.gmra.mrb[0].mxu0 %v1411
        %v2836 = vpop.f32.mrb[0].mxu0
        %v2837 = vadd.f32 0.0, %v2836
        %v2838 = vpop.f32.mrb[0].mxu0
        %v2839 = vpop.f32.mrb[0].mxu0
        %v2840 = vadd.f32 0.0, %v2839
        %v2841 = vpop.f32.mrb[0].mxu0
        %2842 = vmatprep.mubr.bf16.mxu0 0
        %2843 = vmatmul.mubr.bf16.gmra.mrb[0].mxu0 %v1414
        %v2844 = vpop.f32.mrb[0].mxu0
        %v2845 = vadd.f32 0.0, %v2844
        %v2846 = vpop.f32.mrb[0].mxu0
        %v2847 = vpop.f32.mrb[0].mxu0
        %v2848 = vadd.f32 0.0, %v2847
        %v2849 = vpop.f32.mrb[0].mxu0
        %2850 = vmatprep.mubr.bf16.mxu0 0
        %2851 = vmatmul.mubr.bf16.gmra.mrb[0].mxu0 %v1417
        %v2852 = vpop.f32.mrb[0].mxu0
        %v2853 = vadd.f32 0.0, %v2852
        %v2854 = vpop.f32.mrb[0].mxu0
        %v2855 = vpop.f32.mrb[0].mxu0
        %v2856 = vadd.f32 0.0, %v2855
        %v2857 = vpop.f32.mrb[0].mxu0
        %2858 = vmatprep.mubr.bf16.mxu0 0
        %2859 = vmatmul.mubr.bf16.gmra.mrb[0].mxu0 %v2063
        %v2860 = vpop.f32.mrb[0].mxu0
        %v2861 = vadd.f32 0.0, %v2860
        %v2862 = vpop.f32.mrb[0].mxu0
        %v2863 = vpop.f32.mrb[0].mxu0
        %v2864 = vadd.f32 0.0, %v2863
        %v2865 = vpop.f32.mrb[0].mxu0
        %2866 = vmatprep.mubr.bf16.mxu0 0
        %2867 = vmatmul.mubr.bf16.gmra.mrb[0].mxu0 %v2709
        %v2868 = vpop.f32.mrb[0].mxu0
        %v2869 = vadd.f32 0.0, %v2868
        %v2870 = vpop.f32.mrb[0].mxu0
        %v2871 = vpop.f32.mrb[0].mxu0
        %v2872 = vadd.f32 0.0, %v2871
        %v2873 = vpop.f32.mrb[0].mxu0
        %2874 = vdwg.mxu0
        %v2875 = vadd.f32 %v2663, %v2749
        %v2876 = vadd.f32 %v2664, %v2752
        %v2877 = vadd.f32 %v2665, %v2757
        %v2878 = vadd.f32 %v2666, %v2760
        %v2879 = vadd.f32 %v2667, %v2765
        %v2880 = vadd.f32 %v2668, %v2768
        %v2881 = vadd.f32 %v2669, %v2773
        %v2882 = vadd.f32 %v2670, %v2776
        %v2883 = vadd.f32 %v2671, %v2781
        %v2884 = vadd.f32 %v2672, %v2784
        %v2885 = vadd.f32 %v2673, %v2789
        %v2886 = vadd.f32 %v2674, %v2792
        %v2887 = vadd.f32 %v2675, %v2797
        %v2888 = vadd.f32 %v2676, %v2800
        %v2889 = vadd.f32 %v2677, %v2805
        %v2890 = vadd.f32 %v2678, %v2808
        %v2891 = vadd.f32 %v2679, %v2813
        %v2892 = vadd.f32 %v2680, %v2816
        %v2893 = vadd.f32 %v2681, %v2821
        %v2894 = vadd.f32 %v2682, %v2824
        %v2895 = vadd.f32 %v2683, %v2829
        %v2896 = vadd.f32 %v2684, %v2832
        %v2897 = vadd.f32 %v2685, %v2837
        %v2898 = vadd.f32 %v2686, %v2840
        %v2899 = vadd.f32 %v2687, %v2845
        %v2900 = vadd.f32 %v2688, %v2848
        %v2901 = vadd.f32 %v2689, %v2853
        %v2902 = vadd.f32 %v2690, %v2856
        %v2903 = vadd.f32 %v2691, %v2861
        %v2904 = vadd.f32 %v2692, %v2864
        %v2905 = vadd.f32 %v2693, %v2869
        %v2906 = vadd.f32 %v2694, %v2872
        %2907 = vst [vmem:[#allocation2] sm:$0xff] %v2875
        %2908 = vst [vmem:[#allocation2 + $0x8] sm:$0xff] %v2876
        %2909 = vst [vmem:[#allocation2 + $0x10] sm:$0xff] %v2877
        %2910 = vst [vmem:[#allocation2 + $0x18] sm:$0xff] %v2878
        %2911 = vst [vmem:[#allocation2 + $0x20] sm:$0xff] %v2879
        %2912 = vst [vmem:[#allocation2 + $0x28] sm:$0xff] %v2880
        %2913 = vst [vmem:[#allocation2 + $0x30] sm:$0xff] %v2881
        %2914 = vst [vmem:[#allocation2 + $0x38] sm:$0xff] %v2882
        %2915 = vst [vmem:[#allocation2 + $0x40] sm:$0xff] %v2883
        %2916 = vst [vmem:[#allocation2 + $0x48] sm:$0xff] %v2884
        %2917 = vst [vmem:[#allocation2 + $0x50] sm:$0xff] %v2885
        %2918 = vst [vmem:[#allocation2 + $0x58] sm:$0xff] %v2886
        %2919 = vst [vmem:[#allocation2 + $0x60] sm:$0xff] %v2887
        %2920 = vst [vmem:[#allocation2 + $0x68] sm:$0xff] %v2888
        %2921 = vst [vmem:[#allocation2 + $0x70] sm:$0xff] %v2889
        %2922 = vst [vmem:[#allocation2 + $0x78] sm:$0xff] %v2890
        %2923 = vst [vmem:[#allocation2 + $0x80] sm:$0xff] %v2891
        %2924 = vst [vmem:[#allocation2 + $0x88] sm:$0xff] %v2892
        %2925 = vst [vmem:[#allocation2 + $0x90] sm:$0xff] %v2893
        %2926 = vst [vmem:[#allocation2 + $0x98] sm:$0xff] %v2894
        %2927 = vst [vmem:[#allocation2 + $0xa0] sm:$0xff] %v2895
        %2928 = vst [vmem:[#allocation2 + $0xa8] sm:$0xff] %v2896
        %2929 = vst [vmem:[#allocation2 + $0xb0] sm:$0xff] %v2897
        %2930 = vst [vmem:[#allocation2 + $0xb8] sm:$0xff] %v2898
        %2931 = vst [vmem:[#allocation2 + $0xc0] sm:$0xff] %v2899
        %2932 = vst [vmem:[#allocation2 + $0xc8] sm:$0xff] %v2900
        %2933 = vst [vmem:[#allocation2 + $0xd0] sm:$0xff] %v2901
        %2934 = vst [vmem:[#allocation2 + $0xd8] sm:$0xff] %v2902
        %2935 = vst [vmem:[#allocation2 + $0xe0] sm:$0xff] %v2903
        %2936 = vst [vmem:[#allocation2 + $0xe8] sm:$0xff] %v2904
        %2937 = vst [vmem:[#allocation2 + $0xf0] sm:$0xff] %v2905
        %2938 = vst [vmem:[#allocation2 + $0xf8] sm:$0xff] %v2906
        %v2939 = vld [vmem:[#allocation2] ss:$2 sm:$0xff]
        %s2940 = scalar_lea.vmem [#allocation2], 16
        %v2941 = vld [vmem:[%s2940] ss:$2 sm:$0xff]
        %s2942 = scalar_lea.vmem [#allocation2], 32
        %v2943 = vld [vmem:[%s2942] ss:$2 sm:$0xff]
        %s2944 = scalar_lea.vmem [#allocation2], 48
        %v2945 = vld [vmem:[%s2944] ss:$2 sm:$0xff]
        %s2946 = scalar_lea.vmem [#allocation2], 64
        %v2947 = vld [vmem:[%s2946] ss:$2 sm:$0xff]
        %s2948 = scalar_lea.vmem [#allocation2], 80
        %v2949 = vld [vmem:[%s2948] ss:$2 sm:$0xff]
        %s2950 = scalar_lea.vmem [#allocation2], 96
        %v2951 = vld [vmem:[%s2950] ss:$2 sm:$0xff]
        %s2952 = scalar_lea.vmem [#allocation2], 112
        %v2953 = vld [vmem:[%s2952] ss:$2 sm:$0xff]
        %s2954 = scalar_lea.vmem [#allocation2], 128
        %v2955 = vld [vmem:[%s2954] ss:$2 sm:$0xff]
        %s2956 = scalar_lea.vmem [#allocation2], 144
        %v2957 = vld [vmem:[%s2956] ss:$2 sm:$0xff]
        %s2958 = scalar_lea.vmem [#allocation2], 160
        %v2959 = vld [vmem:[%s2958] ss:$2 sm:$0xff]
        %s2960 = scalar_lea.vmem [#allocation2], 176
        %v2961 = vld [vmem:[%s2960] ss:$2 sm:$0xff]
        %s2962 = scalar_lea.vmem [#allocation2], 192
        %v2963 = vld [vmem:[%s2962] ss:$2 sm:$0xff]
        %s2964 = scalar_lea.vmem [#allocation2], 208
        %v2965 = vld [vmem:[%s2964] ss:$2 sm:$0xff]
        %s2966 = scalar_lea.vmem [#allocation2], 224
        %v2967 = vld [vmem:[%s2966] ss:$2 sm:$0xff]
        %s2968 = scalar_lea.vmem [#allocation2], 240
        %v2969 = vld [vmem:[%s2968] ss:$2 sm:$0xff]
        %s2970 = scalar_lea.vmem [#allocation2], 1
        %v2971 = vld [vmem:[%s2970] ss:$2 sm:$0xff]
        %s2972 = scalar_lea.vmem [#allocation2], 17
        %v2973 = vld [vmem:[%s2972] ss:$2 sm:$0xff]
        %s2974 = scalar_lea.vmem [#allocation2], 33
        %v2975 = vld [vmem:[%s2974] ss:$2 sm:$0xff]
        %s2976 = scalar_lea.vmem [#allocation2], 49
        %v2977 = vld [vmem:[%s2976] ss:$2 sm:$0xff]
        %s2978 = scalar_lea.vmem [#allocation2], 65
        %v2979 = vld [vmem:[%s2978] ss:$2 sm:$0xff]
        %s2980 = scalar_lea.vmem [#allocation2], 81
        %v2981 = vld [vmem:[%s2980] ss:$2 sm:$0xff]
        %s2982 = scalar_lea.vmem [#allocation2], 97
        %v2983 = vld [vmem:[%s2982] ss:$2 sm:$0xff]
        %s2984 = scalar_lea.vmem [#allocation2], 113
        %v2985 = vld [vmem:[%s2984] ss:$2 sm:$0xff]
        %s2986 = scalar_lea.vmem [#allocation2], 129
        %v2987 = vld [vmem:[%s2986] ss:$2 sm:$0xff]
        %s2988 = scalar_lea.vmem [#allocation2], 145
        %v2989 = vld [vmem:[%s2988] ss:$2 sm:$0xff]
        %s2990 = scalar_lea.vmem [#allocation2], 161
        %v2991 = vld [vmem:[%s2990] ss:$2 sm:$0xff]
        %s2992 = scalar_lea.vmem [#allocation2], 177
        %v2993 = vld [vmem:[%s2992] ss:$2 sm:$0xff]
        %s2994 = scalar_lea.vmem [#allocation2], 193
        %v2995 = vld [vmem:[%s2994] ss:$2 sm:$0xff]
        %s2996 = scalar_lea.vmem [#allocation2], 209
        %v2997 = vld [vmem:[%s2996] ss:$2 sm:$0xff]
        %s2998 = scalar_lea.vmem [#allocation2], 225
        %v2999 = vld [vmem:[%s2998] ss:$2 sm:$0xff]
        %s3000 = scalar_lea.vmem [#allocation2], 241
        %v3001 = vld [vmem:[%s3000] ss:$2 sm:$0xff]
        %v3002 = vmax.f32 %v2939, %v2971
        %v3003 = vmax.f32 %v2941, %v2973
        %v3004 = vmax.f32 %v2943, %v2975
        %v3005 = vmax.f32 %v2945, %v2977
        %v3006 = vmax.f32 %v2947, %v2979
        %v3007 = vmax.f32 %v2949, %v2981
        %v3008 = vmax.f32 %v2951, %v2983
        %v3009 = vmax.f32 %v2953, %v2985
        %v3010 = vmax.f32 %v2955, %v2987
        %v3011 = vmax.f32 %v2957, %v2989
        %v3012 = vmax.f32 %v2959, %v2991
        %v3013 = vmax.f32 %v2961, %v2993
        %v3014 = vmax.f32 %v2963, %v2995
        %v3015 = vmax.f32 %v2965, %v2997
        %v3016 = vmax.f32 %v2967, %v2999
        %v3017 = vmax.f32 %v2969, %v3001
        %v3018 = vmax.f32 %v3002, %v3003
        %v3019 = vmax.f32 %v3004, %v3005
        %v3020 = vmax.f32 %v3006, %v3007
        %v3021 = vmax.f32 %v3008, %v3009
        %v3022 = vmax.f32 %v3010, %v3011
        %v3023 = vmax.f32 %v3012, %v3013
        %v3024 = vmax.f32 %v3014, %v3015
        %v3025 = vmax.f32 %v3016, %v3017
        %v3026 = vld [vmem:[%s2] sm:$0x1]
        %v3028 = vlaneseq
        %v3029 = vshrl.u32 %v3028, 7
        %v3030 = vsub.s32 0, %v3029
        %v3031 = vrot.slane %v3026, %v3030
        %v3033 = vadd.f32 %v3018, %v3031
        %v3034 = vadd.f32 %v3019, %v3031
        %v3035 = vadd.f32 %v3020, %v3031
        %v3036 = vadd.f32 %v3021, %v3031
        %v3037 = vadd.f32 %v3022, %v3031
        %v3038 = vadd.f32 %v3023, %v3031
        %v3039 = vadd.f32 %v3024, %v3031
        %v3040 = vadd.f32 %v3025, %v3031
        %v3041 = vadd.f32 %v3033, %v3034
        %v3042 = vadd.f32 %v3041, %v3035
        %v3043 = vadd.f32 %v3042, %v3036
        %v3044 = vadd.f32 %v3043, %v3037
        %v3045 = vadd.f32 %v3044, %v3038
        %v3046 = vadd.f32 %v3045, %v3039
        %v3047 = vadd.f32 %v3046, %v3040
        %v3048 = vrot.slane %v3047, 4
        %v3049 = vadd.f32 %v3047, %v3048
        %v3050 = vrot.slane %v3049, 2
        %v3051 = vadd.f32 %v3049, %v3050
        %v3052 = vrot.slane %v3051, 1
        %v3053 = vadd.f32 %v3051, %v3052
        %v3054 = vmul.f32 %v3053, 0.015625
        %v3055 = vsub.f32 %v3033, %v3054
        %v3056 = vsub.f32 %v3034, %v3054
        %v3057 = vsub.f32 %v3035, %v3054
        %v3058 = vsub.f32 %v3036, %v3054
        %v3059 = vsub.f32 %v3037, %v3054
        %v3060 = vsub.f32 %v3038, %v3054
        %v3061 = vsub.f32 %v3039, %v3054
        %v3062 = vsub.f32 %v3040, %v3054
        %v3063 = vmul.f32 %v3055, %v3055
        %v3064 = vmul.f32 %v3056, %v3056
        %v3065 = vmul.f32 %v3057, %v3057
        %v3066 = vmul.f32 %v3058, %v3058
        %v3067 = vmul.f32 %v3059, %v3059
        %v3068 = vmul.f32 %v3060, %v3060
        %v3069 = vmul.f32 %v3061, %v3061
        %v3070 = vmul.f32 %v3062, %v3062
        %v3071 = vadd.f32 %v3063, %v3064
        %v3072 = vadd.f32 %v3071, %v3065
        %v3073 = vadd.f32 %v3072, %v3066
        %v3074 = vadd.f32 %v3073, %v3067
        %v3075 = vadd.f32 %v3074, %v3068
        %v3076 = vadd.f32 %v3075, %v3069
        %v3077 = vadd.f32 %v3076, %v3070
        %v3078 = vrot.slane %v3077, 4
        %v3079 = vadd.f32 %v3077, %v3078
        %v3080 = vrot.slane %v3079, 2
        %v3081 = vadd.f32 %v3079, %v3080
        %v3082 = vrot.slane %v3081, 1
        %v3083 = vadd.f32 %v3081, %v3082
        %vm3084 = vcmask 1040384
        %v3085 = vsel %vm3084, %v3053, %v3083
        %3086 = vst [vmem:[%s182] sm:$0x3] %v3085
        %s3087 = sand.u32 %s109, 1
        %s3088 = scalar_lea.sflag [#allocation4], %s3087
        %s3089 = sand.u32 %s109, 1
        %s3090 = smul.addr %s3089, 2
        %s3091 = scalar_lea.vmem [#allocation3], %s3090
        // Predicated region
        $region33: #{tpu_custom_call.1} parent=31 // pred_check
          %p3092 = pneg %p119
        $region34: #{tpu_custom_call.1} parent=31 // pred_check_branch
          %3094 = sbr.rel (%p3092) target = $region36
        $region35: #{tpu_custom_call.1} parent=31 // pred_region
          %s3095 = sadd.s32 %s21, %s22
          %s3097 = ssub.s32 32, 32
          %3098 = vsyncadd %s3088, %s3097
          %s3099 = smul.addr %s3095, 32
          %s3100 = scalar_lea.hbm %s3, %s3099
          %s3102 = sshll.u32 %s3091, 4
          %s3103 = int_to_ptr.vmem [resolvable:$true] %s3102
          %3105 = dma.vmem_to_hbm [thread:$0]  %s3103, 32, %s3100, %s3088
        $region36: #{tpu_custom_call.1} parent=31 // pred_fallthru
          _
      $region32: #{tpu_custom_call.1} parent=5 // pred_fallthru
        _
      %p3106 = scmp.le.s32.totalorder 2, %s12
      // Predicated region
      $region37: #{tpu_custom_call.1} parent=5 // pred_check
        %p3107 = pneg %p3106
      $region38: #{tpu_custom_call.1} parent=5 // pred_check_branch
        %3109 = sbr.rel (%p3107) target = $region40
      $region39: #{tpu_custom_call.1} parent=5 // pred_region
        %s3110 = ssub.s32 %s12, 2
        // Predicated region
        $region41: #{tpu_custom_call.1} parent=39 // pred_check
          %p3111 = pneg %p125
        $region42: #{tpu_custom_call.1} parent=39 // pred_check_branch
          %3113 = sbr.rel (%p3111) target = $region44
        $region43: #{tpu_custom_call.1} parent=39 // pred_region
          %s3114 = sand.u32 %s110, 1
          %s3115 = scalar_lea.sflag [#allocation4], %s3114
          %s3116 = sand.u32 %s110, 1
          %s3117 = smul.addr %s3116, 2
          %s3118 = scalar_lea.vmem [#allocation3], %s3117
          %3119 = dma.done %s3115, 32
        $region44: #{tpu_custom_call.1} parent=39 // pred_fallthru
          _
      $region40: #{tpu_custom_call.1} parent=5 // pred_fallthru
        _
    $region6: #{tpu_custom_call.1} parent=1 // loop_footer
      %s16 = sadd.s32 1, %s12
    $region7: #{tpu_custom_call.1} parent=1 // loop_footer_branch
      %11 = sbr.rel target = $region3
    $region8: #{tpu_custom_call.1} parent=1 // loop_exit
      _
    %3120 = vsyncpa [#allocation4], 1
    %s3121 = scalar_lea.sflag [#allocation4], 1
    %3122 = vsyncpa %s3121, 1

</llo_original>
